<compile_context>
chip_gen: v7x
topology: tpu7x:2x2x1
jax: 0.10.0
libtpu: 0.0.40
codegen_flags: <defaults>
</compile_context>

<pallas_src>
import functools
import math

import numpy as np
import jax
import jax.numpy as jnp
from jax import lax
from jax.experimental import pallas as pl
from jax.experimental.pallas import tpu as pltpu


# ---------------------------------------------------------------------------
# kernel
# ---------------------------------------------------------------------------
def _dw3x3(a, w_ref, bias, sh_ref, sw_ref):
    """Depthwise 3x3 'same' conv on a (C, HW) tile, separably factored.

    a:      (C, HW) activations.
    w_ref:  (9, C, 1) per-tap, per-channel weights (tap = i*3 + j, i = kernel
            row, j = kernel col; BN scale folded in).
    bias:   (C, 1) folded BN shift.
    sh_ref: (2, HW, HW) row-shift matrices for dH = -1, +1 (dH = 0 is identity).
    sw_ref: (2, HW, HW) col-shift matrices for dW = -1, +1 (dW = 0 is identity).

    Uses S_{ij} = P_i Q_j and the fact that per-channel scaling commutes with
    right-multiplication: 4 MXU matmuls instead of 9.
    """
    r0 = jnp.dot(a, sh_ref[0], preferred_element_type=jnp.float32)   # dH = -1
    r2 = jnp.dot(a, sh_ref[1], preferred_element_type=jnp.float32)   # dH = +1

    def mix(j):  # weighted combination of the three row-shifted copies
        return r0 * w_ref[j] + a * w_ref[3 + j] + r2 * w_ref[6 + j]

    acc = mix(1)                                                      # dW = 0
    acc = acc + jnp.dot(mix(0), sw_ref[0], preferred_element_type=jnp.float32)
    acc = acc + jnp.dot(mix(2), sw_ref[1], preferred_element_type=jnp.float32)
    return acc + bias


def _ghost_bottleneck_kernel(x_ref, sh_ref, sw_ref,
                             w1p_ref, b1p_ref, w1c_ref, b1c_ref,
                             wse1a_ref, wse1b_ref, bse1_ref,
                             wse2a_ref, bse2a_ref, wse2b_ref, bse2b_ref,
                             w2pa_ref, w2pb_ref, b2p_ref, w2c_ref, b2c_ref,
                             o_ref, *, oup, use_se, inv_hw, split_store):
    x = x_ref[0].astype(jnp.float32)                          # (Cin, HW)

    # ---- GhostModule 1: 1x1 primary conv + BN + ReLU ----------------------
    x1 = jnp.dot(w1p_ref[...], x, preferred_element_type=jnp.float32)
    x1 = jnp.maximum(x1 + b1p_ref[...], 0.0)                  # (init1, HW)

    # ---- GhostModule 1: depthwise 3x3 cheap op + BN + ReLU ----------------
    x2 = jnp.maximum(_dw3x3(x1, w1c_ref, b1c_ref[...], sh_ref, sw_ref), 0.0)

    # ---- Squeeze-and-Excite (weights pre-split on host, no concat) --------
    if use_se:
        p1 = jnp.sum(x1, axis=1, keepdims=True) * inv_hw      # (init1, 1)
        p2 = jnp.sum(x2, axis=1, keepdims=True) * inv_hw      # (init1, 1)
        mid = jnp.dot(wse1a_ref[...], p1, preferred_element_type=jnp.float32)
        mid = mid + jnp.dot(wse1b_ref[...], p2, preferred_element_type=jnp.float32)
        mid = jnp.maximum(mid + bse1_ref[...], 0.0)           # (cmid, 1)
        y1 = jnp.clip(jnp.dot(wse2a_ref[...], mid, preferred_element_type=jnp.float32)
                      + bse2a_ref[...], 0.0, 1.0)             # (init1, 1)
        y2 = jnp.clip(jnp.dot(wse2b_ref[...], mid, preferred_element_type=jnp.float32)
                      + bse2b_ref[...], 0.0, 1.0)             # (init1, 1)
        x1 = x1 * y1
        x2 = x2 * y2

    # ---- GhostModule 2: 1x1 primary conv + BN (no ReLU), split weights ----
    z1 = jnp.dot(w2pa_ref[...], x1, preferred_element_type=jnp.float32)
    z1 = z1 + jnp.dot(w2pb_ref[...], x2, preferred_element_type=jnp.float32)
    z1 = z1 + b2p_ref[...]                                    # (init2, HW)
    z2 = _dw3x3(z1, w2c_ref, b2c_ref[...], sh_ref, sw_ref)    # (init2, HW)

    # ---- assemble output + identity shortcut (stride==1, inp==oup) --------
    init2 = z1.shape[0]
    if split_store:
        o_ref[0, 0:init2, :] = (z1 + x[0:init2, :]).astype(o_ref.dtype)
        o_ref[0, init2:oup, :] = (z2[0:oup - init2, :]
                                  + x[init2:oup, :]).astype(o_ref.dtype)
    else:
        out = jnp.concatenate([z1, z2], axis=0)[:oup, :]
        o_ref[0] = (out + x).astype(o_ref.dtype)


# ---------------------------------------------------------------------------
# host-side helpers / wrapper
# ---------------------------------------------------------------------------
def _bn_fold(gamma, beta, mean, var, eps=1e-5):
    scale = gamma / jnp.sqrt(var + eps)
    shift = beta - mean * scale
    return scale, shift


def _make_shift_mats(H, W):
    """(2,HW,HW) row-shift and (2,HW,HW) col-shift 0/1 matrices ('same' pad).

    SH[k][q, p] == 1 iff output p=(h,w) reads input q=(h+d, w), d = (-1,+1)[k];
    SW[k][q, p] == 1 iff output p=(h,w) reads input q=(h, w+d).
    """
    hw = H * W
    SH = np.zeros((2, hw, hw), np.float32)
    SW = np.zeros((2, hw, hw), np.float32)
    for k, d in enumerate((-1, 1)):
        for h in range(H):
            for w in range(W):
                hh = h + d
                if 0 <= hh < H:
                    SH[k, hh * W + w, h * W + w] = 1.0
                ww = w + d
                if 0 <= ww < W:
                    SW[k, h * W + ww, h * W + w] = 1.0
    return jnp.asarray(SH), jnp.asarray(SW)


def ghost_bottleneck_forward(x, params, *, use_se=True, stride=1):
    """GhostBottleneck forward.  x: (B, Cin, H, W) -> (B, oup, H, W)."""
    # TODO(synk): the stride==2 path (strided depthwise conv between the two
    # ghost modules) and the projection shortcut (dwconv + 1x1 conv + BN) are
    # not implemented; dlshogi's ghostnet15 blocks use stride=1 with inp==oup.
    assert stride == 1, "only the stride==1 / identity-shortcut path is implemented"

    B, Cin, H, W = x.shape
    hw = H * W
    init1 = params['g1.primary.w'].shape[0]
    hidden = params['g2.primary.w'].shape[1]
    init2 = params['g2.primary.w'].shape[0]
    oup = Cin                                  # identity shortcut => inp == oup
    assert init1 < hidden <= 2 * init1 and oup <= 2 * init2
    n2 = hidden - init1                        # x2 channels actually used

    def fold_pw(w, bn):
        g, b_, m, v = bn
        s, sh = _bn_fold(g, b_, m, v)
        return (w * s[:, None]).astype(jnp.float32), sh[:, None].astype(jnp.float32)

    def fold_dw(w, bn):
        g, b_, m, v = bn
        s, sh = _bn_fold(g, b_, m, v)
        taps = (w.reshape(w.shape[0], 9) * s[:, None]).T       # (9, C)
        return taps[:, :, None].astype(jnp.float32), sh[:, None].astype(jnp.float32)

    w1p, b1p = fold_pw(params['g1.primary.w'], params['g1.primary.bn'])
    w1c, b1c = fold_dw(params['g1.cheap.w'], params['g1.cheap.bn'])
    w2p, b2p = fold_pw(params['g2.primary.w'], params['g2.primary.bn'])
    w2c, b2c = fold_dw(params['g2.cheap.w'], params['g2.cheap.bn'])

    # Split the hidden-dim consumers so the kernel never concatenates x1/x2.
    w2p_a = w2p[:, :init1]
    w2p_b = jnp.pad(w2p[:, init1:hidden], ((0, 0), (0, init1 - n2)))

    if use_se:
        wse1 = params['se.fc1.w'].astype(jnp.float32)
        bse1 = params['se.fc1.b'].reshape(-1, 1).astype(jnp.float32)
        wse2 = params['se.fc2.w'].astype(jnp.float32)
        bse2 = params['se.fc2.b'].reshape(-1, 1).astype(jnp.float32)
        wse1_a = wse1[:, :init1]
        wse1_b = jnp.pad(wse1[:, init1:hidden], ((0, 0), (0, init1 - n2)))
        wse2_a = wse2[:init1, :]
        bse2_a = bse2[:init1, :]
        wse2_b = jnp.pad(wse2[init1:hidden, :], ((0, init1 - n2), (0, 0)))
        bse2_b = jnp.pad(bse2[init1:hidden, :], ((0, init1 - n2), (0, 0)))
    else:  # tiny placeholders; the kernel statically skips the SE branch
        zz = jnp.zeros((1, 1), jnp.float32)
        wse1_a = wse1_b = bse1 = wse2_a = bse2_a = wse2_b = bse2_b = zz

    SH, SW = _make_shift_mats(H, W)
    x_flat = x.reshape(B, Cin, hw)
    split_store = (init2 % 8 == 0)             # aligned direct sub-tile stores

    def full_spec(arr):
        return pl.BlockSpec(arr.shape, lambda b, _nd=arr.ndim: (0,) * _nd)

    kernel = functools.partial(
        _ghost_bottleneck_kernel,
        oup=oup, use_se=use_se, inv_hw=1.0 / hw, split_store=split_store)

    args = (x_flat, SH, SW, w1p, b1p, w1c, b1c,
            wse1_a, wse1_b, bse1, wse2_a, bse2_a, wse2_b, bse2_b,
            w2p_a, w2p_b, b2p, w2c, b2c)

    out_flat = pl.pallas_call(
        kernel,
        out_shape=jax.ShapeDtypeStruct((B, oup, hw), x.dtype),
        grid_spec=pltpu.PrefetchScalarGridSpec(
            num_scalar_prefetch=0,
            grid=(B,),
            in_specs=[pl.BlockSpec((1, Cin, hw), lambda b: (b, 0, 0))]
                    + [full_spec(a) for a in args[1:]],
            out_specs=pl.BlockSpec((1, oup, hw), lambda b: (b, 0, 0)),
        ),
        compiler_params=pltpu.CompilerParams(
            dimension_semantics=("parallel",),
        ),
    )(*args)

    return out_flat.reshape(B, oup, H, W)


# ---------------------------------------------------------------------------
# pure-JAX reference (inference-mode BN), for verification
# ---------------------------------------------------------------------------
def _reference_forward(x, params, *, use_se=True, eps=1e-5):
    hp = lax.Precision.HIGHEST

    def bn(h, bnp):
        g, b_, m, v = bnp
        s = g / jnp.sqrt(v + eps)
        return h * s[None, :, None, None] + (b_ - m * s)[None, :, None, None]

    def conv1x1(h, w):
        return jnp.einsum('bchw,oc->bohw', h, w, precision=hp)

    def dwconv3x3(h, w):
        return lax.conv_general_dilated(
            h, w[:, None, :, :], window_strides=(1, 1),
            padding=((1, 1), (1, 1)),
            dimension_numbers=('NCHW', 'OIHW', 'NCHW'),
            feature_group_count=h.shape[1], precision=hp)

    def ghost(h, pw, pbn, cw, cbn, oup, relu):
        x1 = bn(conv1x1(h, pw), pbn)
        if relu:
            x1 = jnp.maximum(x1, 0.0)
        x2 = bn(dwconv3x3(x1, cw), cbn)
        if relu:
            x2 = jnp.maximum(x2, 0.0)
        return jnp.concatenate([x1, x2], axis=1)[:, :oup]

    B, Cin, H, W = x.shape
    hidden = params['g2.primary.w'].shape[1]
    oup = Cin

    h = ghost(x, params['g1.primary.w'], params['g1.primary.bn'],
              params['g1.cheap.w'], params['g1.cheap.bn'], hidden, True)
    if use_se:
        y = jnp.mean(h, axis=(2, 3))
        y = jnp.maximum(y @ params['se.fc1.w'].T + params['se.fc1.b'], 0.0)
        y = y @ params['se.fc2.w'].T + params['se.fc2.b']
        y = jnp.clip(y, 0.0, 1.0)
        h = h * y[:, :, None, None]
    out = ghost(h, params['g2.primary.w'], params['g2.primary.bn'],
                params['g2.cheap.w'], params['g2.cheap.bn'], oup, False)
    return out + x


# ---------------------------------------------------------------------------
if __name__ == "__main__":
    key = jax.random.PRNGKey(0)
    ks = iter(jax.random.split(key, 32))

    # Small GhostBottleneck consistent with dlshogi: 9x9 board, stride=1,
    # inp == oup (identity shortcut), use_se=True.
    B, Cin, H, W = 2, 16, 9, 9
    hidden, oup = 32, 16
    init1 = math.ceil(hidden / 2)
    init2 = math.ceil(oup / 2)
    cmid = hidden // 4

    def nrm(shape, scale=0.2):
        return scale * jax.random.normal(next(ks), shape, dtype=jnp.float32)

    def bnp(c):
        gamma = 1.0 + 0.1 * jax.random.normal(next(ks), (c,), dtype=jnp.float32)
        beta = 0.1 * jax.random.normal(next(ks), (c,), dtype=jnp.float32)
        mean = 0.1 * jax.random.normal(next(ks), (c,), dtype=jnp.float32)
        var = 1.0 + 0.1 * jax.random.uniform(next(ks), (c,), dtype=jnp.float32)
        return (gamma, beta, mean, var)

    params = {
        'g1.primary.w': nrm((init1, Cin)),
        'g1.primary.bn': bnp(init1),
        'g1.cheap.w': nrm((init1, 3, 3)),
        'g1.cheap.bn': bnp(init1),
        'se.fc1.w': nrm((cmid, hidden)),
        'se.fc1.b': nrm((cmid,)),
        'se.fc2.w': nrm((hidden, cmid)),
        'se.fc2.b': nrm((hidden,)),
        'g2.primary.w': nrm((init2, hidden)),
        'g2.primary.bn': bnp(init2),
        'g2.cheap.w': nrm((init2, 3, 3)),
        'g2.cheap.bn': bnp(init2),
    }

    x = jax.random.normal(next(ks), (B, Cin, H, W), dtype=jnp.float32)

    for use_se in (True, False):
        out = jax.block_until_ready(ghost_bottleneck_forward(x, params, use_se=use_se))
        ref = _reference_forward(x, params, use_se=use_se)
        assert out.shape == (B, oup, H, W)
        assert out.dtype == x.dtype
        err = float(jnp.max(jnp.abs(out - ref)))
        assert jnp.allclose(out, ref, atol=2e-2, rtol=2e-2), f"max abs err {err}"

    print("KERNEL_OK")
</pallas_src>

<mosaic_0001>
module attributes {stable_mosaic.version = 11 : i64} {
  func.func @_ghost_bottleneck_kernel(%arg0: i32, %arg1: memref<1x16x81xf32, #tpu.memory_space<vmem>>, %arg2: memref<2x81x81xf32, #tpu.memory_space<vmem>>, %arg3: memref<2x81x81xf32, #tpu.memory_space<vmem>>, %arg4: memref<16x16xf32, #tpu.memory_space<vmem>>, %arg5: memref<16x1xf32, #tpu.memory_space<vmem>>, %arg6: memref<9x16x1xf32, #tpu.memory_space<vmem>>, %arg7: memref<16x1xf32, #tpu.memory_space<vmem>>, %arg8: memref<8x16xf32, #tpu.memory_space<vmem>>, %arg9: memref<8x16xf32, #tpu.memory_space<vmem>>, %arg10: memref<8x1xf32, #tpu.memory_space<vmem>>, %arg11: memref<16x8xf32, #tpu.memory_space<vmem>>, %arg12: memref<16x1xf32, #tpu.memory_space<vmem>>, %arg13: memref<16x8xf32, #tpu.memory_space<vmem>>, %arg14: memref<16x1xf32, #tpu.memory_space<vmem>>, %arg15: memref<8x16xf32, #tpu.memory_space<vmem>>, %arg16: memref<8x16xf32, #tpu.memory_space<vmem>>, %arg17: memref<8x1xf32, #tpu.memory_space<vmem>>, %arg18: memref<9x8x1xf32, #tpu.memory_space<vmem>>, %arg19: memref<8x1xf32, #tpu.memory_space<vmem>>, %arg20: memref<1x16x81xf32, #tpu.memory_space<vmem>>) attributes {dimension_semantics = [#tpu.dimension_semantics<parallel>], iteration_bounds = array<i64: 2>, scalar_prefetch = 0 : i64, scratch_operands = 0 : i64, tpu.core_type = #tpu.core_type<tc>, window_params = [{transform_indices = @transform_0, window_bounds = array<i64: 1, 16, 81>}, {pipeline_mode = #tpu.pipeline_mode<synchronous>, transform_indices = @transform_1, window_bounds = array<i64: 2, 81, 81>}, {pipeline_mode = #tpu.pipeline_mode<synchronous>, transform_indices = @transform_2, window_bounds = array<i64: 2, 81, 81>}, {pipeline_mode = #tpu.pipeline_mode<synchronous>, transform_indices = @transform_3, window_bounds = array<i64: 16, 16>}, {pipeline_mode = #tpu.pipeline_mode<synchronous>, transform_indices = @transform_4, window_bounds = array<i64: 16, 1>}, {pipeline_mode = #tpu.pipeline_mode<synchronous>, transform_indices = @transform_5, window_bounds = array<i64: 9, 16, 1>}, {pipeline_mode = #tpu.pipeline_mode<synchronous>, transform_indices = @transform_6, window_bounds = array<i64: 16, 1>}, {pipeline_mode = #tpu.pipeline_mode<synchronous>, transform_indices = @transform_7, window_bounds = array<i64: 8, 16>}, {pipeline_mode = #tpu.pipeline_mode<synchronous>, transform_indices = @transform_8, window_bounds = array<i64: 8, 16>}, {pipeline_mode = #tpu.pipeline_mode<synchronous>, transform_indices = @transform_9, window_bounds = array<i64: 8, 1>}, {pipeline_mode = #tpu.pipeline_mode<synchronous>, transform_indices = @transform_10, window_bounds = array<i64: 16, 8>}, {pipeline_mode = #tpu.pipeline_mode<synchronous>, transform_indices = @transform_11, window_bounds = array<i64: 16, 1>}, {pipeline_mode = #tpu.pipeline_mode<synchronous>, transform_indices = @transform_12, window_bounds = array<i64: 16, 8>}, {pipeline_mode = #tpu.pipeline_mode<synchronous>, transform_indices = @transform_13, window_bounds = array<i64: 16, 1>}, {pipeline_mode = #tpu.pipeline_mode<synchronous>, transform_indices = @transform_14, window_bounds = array<i64: 8, 16>}, {pipeline_mode = #tpu.pipeline_mode<synchronous>, transform_indices = @transform_15, window_bounds = array<i64: 8, 16>}, {pipeline_mode = #tpu.pipeline_mode<synchronous>, transform_indices = @transform_16, window_bounds = array<i64: 8, 1>}, {pipeline_mode = #tpu.pipeline_mode<synchronous>, transform_indices = @transform_17, window_bounds = array<i64: 9, 8, 1>}, {pipeline_mode = #tpu.pipeline_mode<synchronous>, transform_indices = @transform_18, window_bounds = array<i64: 8, 1>}, {transform_indices = @transform_19, window_bounds = array<i64: 1, 16, 81>}]} {
    %c0 = arith.constant 0 : index
    %c0_0 = arith.constant 0 : index
    %c0_1 = arith.constant 0 : index
    %0 = vector.load %arg1[%c0, %c0_0, %c0_1] : memref<1x16x81xf32, #tpu.memory_space<vmem>>, vector<1x16x81xf32>
    %1 = vector.shape_cast %0 : vector<1x16x81xf32> to vector<16x81xf32>
    %c0_2 = arith.constant 0 : index
    %c0_3 = arith.constant 0 : index
    %2 = vector.load %arg4[%c0_2, %c0_3] : memref<16x16xf32, #tpu.memory_space<vmem>>, vector<16x16xf32>
    %cst = arith.constant dense<0.000000e+00> : vector<16x81xf32>
    %3 = tpu.matmul %2, %1, %cst {dimension_numbers = #tpu.dot_dimension_numbers<[1], [0], [0], [1], [0, 0, 1, 1], [], []>} : vector<16x16xf32>, vector<16x81xf32>, vector<16x81xf32> -> vector<16x81xf32>
    %c0_4 = arith.constant 0 : index
    %c0_5 = arith.constant 0 : index
    %4 = vector.load %arg5[%c0_4, %c0_5] : memref<16x1xf32, #tpu.memory_space<vmem>>, vector<16x1xf32>
    %5 = vector.broadcast %4 : vector<16x1xf32> to vector<16x81xf32>
    %6 = arith.addf %3, %5 : vector<16x81xf32>
    %cst_6 = arith.constant 0.000000e+00 : f32
    %7 = vector.broadcast %cst_6 : f32 to vector<16x81xf32>
    %8 = arith.maximumf %6, %7 : vector<16x81xf32>
    %c0_7 = arith.constant 0 : index
    %c0_8 = arith.constant 0 : index
    %9 = vector.load %arg7[%c0_7, %c0_8] : memref<16x1xf32, #tpu.memory_space<vmem>>, vector<16x1xf32>
    %c0_9 = arith.constant 0 : index
    %c0_10 = arith.constant 0 : index
    %c0_11 = arith.constant 0 : index
    %10 = vector.load %arg2[%c0_9, %c0_10, %c0_11] : memref<2x81x81xf32, #tpu.memory_space<vmem>>, vector<1x81x81xf32>
    %11 = vector.shape_cast %10 : vector<1x81x81xf32> to vector<81x81xf32>
    %cst_12 = arith.constant dense<0.000000e+00> : vector<16x81xf32>
    %12 = tpu.matmul %8, %11, %cst_12 {dimension_numbers = #tpu.dot_dimension_numbers<[1], [0], [0], [1], [0, 0, 1, 1], [], []>} : vector<16x81xf32>, vector<81x81xf32>, vector<16x81xf32> -> vector<16x81xf32>
    %c1 = arith.constant 1 : index
    %c0_13 = arith.constant 0 : index
    %c0_14 = arith.constant 0 : index
    %13 = vector.load %arg2[%c1, %c0_13, %c0_14] : memref<2x81x81xf32, #tpu.memory_space<vmem>>, vector<1x81x81xf32>
    %14 = vector.shape_cast %13 : vector<1x81x81xf32> to vector<81x81xf32>
    %cst_15 = arith.constant dense<0.000000e+00> : vector<16x81xf32>
    %15 = tpu.matmul %8, %14, %cst_15 {dimension_numbers = #tpu.dot_dimension_numbers<[1], [0], [0], [1], [0, 0, 1, 1], [], []>} : vector<16x81xf32>, vector<81x81xf32>, vector<16x81xf32> -> vector<16x81xf32>
    %c1_16 = arith.constant 1 : index
    %c0_17 = arith.constant 0 : index
    %c0_18 = arith.constant 0 : index
    %16 = vector.load %arg6[%c1_16, %c0_17, %c0_18] : memref<9x16x1xf32, #tpu.memory_space<vmem>>, vector<1x16x1xf32>
    %17 = vector.shape_cast %16 : vector<1x16x1xf32> to vector<16x1xf32>
    %18 = vector.broadcast %17 : vector<16x1xf32> to vector<16x81xf32>
    %19 = arith.mulf %12, %18 : vector<16x81xf32>
    %c4 = arith.constant 4 : index
    %c0_19 = arith.constant 0 : index
    %c0_20 = arith.constant 0 : index
    %20 = vector.load %arg6[%c4, %c0_19, %c0_20] : memref<9x16x1xf32, #tpu.memory_space<vmem>>, vector<1x16x1xf32>
    %21 = vector.shape_cast %20 : vector<1x16x1xf32> to vector<16x1xf32>
    %22 = vector.broadcast %21 : vector<16x1xf32> to vector<16x81xf32>
    %23 = arith.mulf %8, %22 : vector<16x81xf32>
    %24 = arith.addf %19, %23 : vector<16x81xf32>
    %c7 = arith.constant 7 : index
    %c0_21 = arith.constant 0 : index
    %c0_22 = arith.constant 0 : index
    %25 = vector.load %arg6[%c7, %c0_21, %c0_22] : memref<9x16x1xf32, #tpu.memory_space<vmem>>, vector<1x16x1xf32>
    %26 = vector.shape_cast %25 : vector<1x16x1xf32> to vector<16x1xf32>
    %27 = vector.broadcast %26 : vector<16x1xf32> to vector<16x81xf32>
    %28 = arith.mulf %15, %27 : vector<16x81xf32>
    %29 = arith.addf %24, %28 : vector<16x81xf32>
    %c0_23 = arith.constant 0 : index
    %c0_24 = arith.constant 0 : index
    %c0_25 = arith.constant 0 : index
    %30 = vector.load %arg6[%c0_23, %c0_24, %c0_25] : memref<9x16x1xf32, #tpu.memory_space<vmem>>, vector<1x16x1xf32>
    %31 = vector.shape_cast %30 : vector<1x16x1xf32> to vector<16x1xf32>
    %32 = vector.broadcast %31 : vector<16x1xf32> to vector<16x81xf32>
    %33 = arith.mulf %12, %32 : vector<16x81xf32>
    %c3 = arith.constant 3 : index
    %c0_26 = arith.constant 0 : index
    %c0_27 = arith.constant 0 : index
    %34 = vector.load %arg6[%c3, %c0_26, %c0_27] : memref<9x16x1xf32, #tpu.memory_space<vmem>>, vector<1x16x1xf32>
    %35 = vector.shape_cast %34 : vector<1x16x1xf32> to vector<16x1xf32>
    %36 = vector.broadcast %35 : vector<16x1xf32> to vector<16x81xf32>
    %37 = arith.mulf %8, %36 : vector<16x81xf32>
    %38 = arith.addf %33, %37 : vector<16x81xf32>
    %c6 = arith.constant 6 : index
    %c0_28 = arith.constant 0 : index
    %c0_29 = arith.constant 0 : index
    %39 = vector.load %arg6[%c6, %c0_28, %c0_29] : memref<9x16x1xf32, #tpu.memory_space<vmem>>, vector<1x16x1xf32>
    %40 = vector.shape_cast %39 : vector<1x16x1xf32> to vector<16x1xf32>
    %41 = vector.broadcast %40 : vector<16x1xf32> to vector<16x81xf32>
    %42 = arith.mulf %15, %41 : vector<16x81xf32>
    %43 = arith.addf %38, %42 : vector<16x81xf32>
    %c0_30 = arith.constant 0 : index
    %c0_31 = arith.constant 0 : index
    %c0_32 = arith.constant 0 : index
    %44 = vector.load %arg3[%c0_30, %c0_31, %c0_32] : memref<2x81x81xf32, #tpu.memory_space<vmem>>, vector<1x81x81xf32>
    %45 = vector.shape_cast %44 : vector<1x81x81xf32> to vector<81x81xf32>
    %cst_33 = arith.constant dense<0.000000e+00> : vector<16x81xf32>
    %46 = tpu.matmul %43, %45, %cst_33 {dimension_numbers = #tpu.dot_dimension_numbers<[1], [0], [0], [1], [0, 0, 1, 1], [], []>} : vector<16x81xf32>, vector<81x81xf32>, vector<16x81xf32> -> vector<16x81xf32>
    %47 = arith.addf %29, %46 : vector<16x81xf32>
    %c2 = arith.constant 2 : index
    %c0_34 = arith.constant 0 : index
    %c0_35 = arith.constant 0 : index
    %48 = vector.load %arg6[%c2, %c0_34, %c0_35] : memref<9x16x1xf32, #tpu.memory_space<vmem>>, vector<1x16x1xf32>
    %49 = vector.shape_cast %48 : vector<1x16x1xf32> to vector<16x1xf32>
    %50 = vector.broadcast %49 : vector<16x1xf32> to vector<16x81xf32>
    %51 = arith.mulf %12, %50 : vector<16x81xf32>
    %c5 = arith.constant 5 : index
    %c0_36 = arith.constant 0 : index
    %c0_37 = arith.constant 0 : index
    %52 = vector.load %arg6[%c5, %c0_36, %c0_37] : memref<9x16x1xf32, #tpu.memory_space<vmem>>, vector<1x16x1xf32>
    %53 = vector.shape_cast %52 : vector<1x16x1xf32> to vector<16x1xf32>
    %54 = vector.broadcast %53 : vector<16x1xf32> to vector<16x81xf32>
    %55 = arith.mulf %8, %54 : vector<16x81xf32>
    %56 = arith.addf %51, %55 : vector<16x81xf32>
    %c8 = arith.constant 8 : index
    %c0_38 = arith.constant 0 : index
    %c0_39 = arith.constant 0 : index
    %57 = vector.load %arg6[%c8, %c0_38, %c0_39] : memref<9x16x1xf32, #tpu.memory_space<vmem>>, vector<1x16x1xf32>
    %58 = vector.shape_cast %57 : vector<1x16x1xf32> to vector<16x1xf32>
    %59 = vector.broadcast %58 : vector<16x1xf32> to vector<16x81xf32>
    %60 = arith.mulf %15, %59 : vector<16x81xf32>
    %61 = arith.addf %56, %60 : vector<16x81xf32>
    %c1_40 = arith.constant 1 : index
    %c0_41 = arith.constant 0 : index
    %c0_42 = arith.constant 0 : index
    %62 = vector.load %arg3[%c1_40, %c0_41, %c0_42] : memref<2x81x81xf32, #tpu.memory_space<vmem>>, vector<1x81x81xf32>
    %63 = vector.shape_cast %62 : vector<1x81x81xf32> to vector<81x81xf32>
    %cst_43 = arith.constant dense<0.000000e+00> : vector<16x81xf32>
    %64 = tpu.matmul %61, %63, %cst_43 {dimension_numbers = #tpu.dot_dimension_numbers<[1], [0], [0], [1], [0, 0, 1, 1], [], []>} : vector<16x81xf32>, vector<81x81xf32>, vector<16x81xf32> -> vector<16x81xf32>
    %65 = arith.addf %47, %64 : vector<16x81xf32>
    %66 = vector.broadcast %9 : vector<16x1xf32> to vector<16x81xf32>
    %67 = arith.addf %65, %66 : vector<16x81xf32>
    %cst_44 = arith.constant 0.000000e+00 : f32
    %68 = vector.broadcast %cst_44 : f32 to vector<16x81xf32>
    %69 = arith.maximumf %67, %68 : vector<16x81xf32>
    %cst_45 = arith.constant dense<0.000000e+00> : vector<16xf32>
    %70 = vector.multi_reduction <add>, %8, %cst_45 [1] : vector<16x81xf32> to vector<16xf32>
    %71 = vector.shape_cast %70 : vector<16xf32> to vector<16x1xf32>
    %cst_46 = arith.constant 0.0123456791 : f32
    %72 = vector.broadcast %cst_46 : f32 to vector<16x1xf32>
    %73 = arith.mulf %71, %72 : vector<16x1xf32>
    %cst_47 = arith.constant dense<0.000000e+00> : vector<16xf32>
    %74 = vector.multi_reduction <add>, %69, %cst_47 [1] : vector<16x81xf32> to vector<16xf32>
    %75 = vector.shape_cast %74 : vector<16xf32> to vector<16x1xf32>
    %cst_48 = arith.constant 0.0123456791 : f32
    %76 = vector.broadcast %cst_48 : f32 to vector<16x1xf32>
    %77 = arith.mulf %75, %76 : vector<16x1xf32>
    %c0_49 = arith.constant 0 : index
    %c0_50 = arith.constant 0 : index
    %78 = vector.load %arg8[%c0_49, %c0_50] : memref<8x16xf32, #tpu.memory_space<vmem>>, vector<8x16xf32>
    %cst_51 = arith.constant dense<0.000000e+00> : vector<8x1xf32>
    %79 = tpu.matmul %78, %73, %cst_51 {dimension_numbers = #tpu.dot_dimension_numbers<[1], [0], [0], [1], [0, 0, 1, 1], [], []>} : vector<8x16xf32>, vector<16x1xf32>, vector<8x1xf32> -> vector<8x1xf32>
    %c0_52 = arith.constant 0 : index
    %c0_53 = arith.constant 0 : index
    %80 = vector.load %arg9[%c0_52, %c0_53] : memref<8x16xf32, #tpu.memory_space<vmem>>, vector<8x16xf32>
    %cst_54 = arith.constant dense<0.000000e+00> : vector<8x1xf32>
    %81 = tpu.matmul %80, %77, %cst_54 {dimension_numbers = #tpu.dot_dimension_numbers<[1], [0], [0], [1], [0, 0, 1, 1], [], []>} : vector<8x16xf32>, vector<16x1xf32>, vector<8x1xf32> -> vector<8x1xf32>
    %82 = arith.addf %79, %81 : vector<8x1xf32>
    %c0_55 = arith.constant 0 : index
    %c0_56 = arith.constant 0 : index
    %83 = vector.load %arg10[%c0_55, %c0_56] : memref<8x1xf32, #tpu.memory_space<vmem>>, vector<8x1xf32>
    %84 = arith.addf %82, %83 : vector<8x1xf32>
    %cst_57 = arith.constant 0.000000e+00 : f32
    %85 = vector.broadcast %cst_57 : f32 to vector<8x1xf32>
    %86 = arith.maximumf %84, %85 : vector<8x1xf32>
    %c0_58 = arith.constant 0 : index
    %c0_59 = arith.constant 0 : index
    %87 = vector.load %arg11[%c0_58, %c0_59] : memref<16x8xf32, #tpu.memory_space<vmem>>, vector<16x8xf32>
    %cst_60 = arith.constant dense<0.000000e+00> : vector<16x1xf32>
    %88 = tpu.matmul %87, %86, %cst_60 {dimension_numbers = #tpu.dot_dimension_numbers<[1], [0], [0], [1], [0, 0, 1, 1], [], []>} : vector<16x8xf32>, vector<8x1xf32>, vector<16x1xf32> -> vector<16x1xf32>
    %c0_61 = arith.constant 0 : index
    %c0_62 = arith.constant 0 : index
    %89 = vector.load %arg12[%c0_61, %c0_62] : memref<16x1xf32, #tpu.memory_space<vmem>>, vector<16x1xf32>
    %90 = arith.addf %88, %89 : vector<16x1xf32>
    %cst_63 = arith.constant 0.000000e+00 : f32
    %cst_64 = arith.constant 1.000000e+00 : f32
    %91 = vector.broadcast %cst_63 : f32 to vector<16x1xf32>
    %92 = arith.maximumf %91, %90 : vector<16x1xf32>
    %93 = vector.broadcast %cst_64 : f32 to vector<16x1xf32>
    %94 = arith.minimumf %93, %92 : vector<16x1xf32>
    %c0_65 = arith.constant 0 : index
    %c0_66 = arith.constant 0 : index
    %95 = vector.load %arg13[%c0_65, %c0_66] : memref<16x8xf32, #tpu.memory_space<vmem>>, vector<16x8xf32>
    %cst_67 = arith.constant dense<0.000000e+00> : vector<16x1xf32>
    %96 = tpu.matmul %95, %86, %cst_67 {dimension_numbers = #tpu.dot_dimension_numbers<[1], [0], [0], [1], [0, 0, 1, 1], [], []>} : vector<16x8xf32>, vector<8x1xf32>, vector<16x1xf32> -> vector<16x1xf32>
    %c0_68 = arith.constant 0 : index
    %c0_69 = arith.constant 0 : index
    %97 = vector.load %arg14[%c0_68, %c0_69] : memref<16x1xf32, #tpu.memory_space<vmem>>, vector<16x1xf32>
    %98 = arith.addf %96, %97 : vector<16x1xf32>
    %cst_70 = arith.constant 0.000000e+00 : f32
    %cst_71 = arith.constant 1.000000e+00 : f32
    %99 = vector.broadcast %cst_70 : f32 to vector<16x1xf32>
    %100 = arith.maximumf %99, %98 : vector<16x1xf32>
    %101 = vector.broadcast %cst_71 : f32 to vector<16x1xf32>
    %102 = arith.minimumf %101, %100 : vector<16x1xf32>
    %103 = vector.broadcast %94 : vector<16x1xf32> to vector<16x81xf32>
    %104 = arith.mulf %8, %103 : vector<16x81xf32>
    %105 = vector.broadcast %102 : vector<16x1xf32> to vector<16x81xf32>
    %106 = arith.mulf %69, %105 : vector<16x81xf32>
    %c0_72 = arith.constant 0 : index
    %c0_73 = arith.constant 0 : index
    %107 = vector.load %arg15[%c0_72, %c0_73] : memref<8x16xf32, #tpu.memory_space<vmem>>, vector<8x16xf32>
    %cst_74 = arith.constant dense<0.000000e+00> : vector<8x81xf32>
    %108 = tpu.matmul %107, %104, %cst_74 {dimension_numbers = #tpu.dot_dimension_numbers<[1], [0], [0], [1], [0, 0, 1, 1], [], []>} : vector<8x16xf32>, vector<16x81xf32>, vector<8x81xf32> -> vector<8x81xf32>
    %c0_75 = arith.constant 0 : index
    %c0_76 = arith.constant 0 : index
    %109 = vector.load %arg16[%c0_75, %c0_76] : memref<8x16xf32, #tpu.memory_space<vmem>>, vector<8x16xf32>
    %cst_77 = arith.constant dense<0.000000e+00> : vector<8x81xf32>
    %110 = tpu.matmul %109, %106, %cst_77 {dimension_numbers = #tpu.dot_dimension_numbers<[1], [0], [0], [1], [0, 0, 1, 1], [], []>} : vector<8x16xf32>, vector<16x81xf32>, vector<8x81xf32> -> vector<8x81xf32>
    %111 = arith.addf %108, %110 : vector<8x81xf32>
    %c0_78 = arith.constant 0 : index
    %c0_79 = arith.constant 0 : index
    %112 = vector.load %arg17[%c0_78, %c0_79] : memref<8x1xf32, #tpu.memory_space<vmem>>, vector<8x1xf32>
    %113 = vector.broadcast %112 : vector<8x1xf32> to vector<8x81xf32>
    %114 = arith.addf %111, %113 : vector<8x81xf32>
    %c0_80 = arith.constant 0 : index
    %c0_81 = arith.constant 0 : index
    %115 = vector.load %arg19[%c0_80, %c0_81] : memref<8x1xf32, #tpu.memory_space<vmem>>, vector<8x1xf32>
    %c0_82 = arith.constant 0 : index
    %c0_83 = arith.constant 0 : index
    %c0_84 = arith.constant 0 : index
    %116 = vector.load %arg2[%c0_82, %c0_83, %c0_84] : memref<2x81x81xf32, #tpu.memory_space<vmem>>, vector<1x81x81xf32>
    %117 = vector.shape_cast %116 : vector<1x81x81xf32> to vector<81x81xf32>
    %cst_85 = arith.constant dense<0.000000e+00> : vector<8x81xf32>
    %118 = tpu.matmul %114, %117, %cst_85 {dimension_numbers = #tpu.dot_dimension_numbers<[1], [0], [0], [1], [0, 0, 1, 1], [], []>} : vector<8x81xf32>, vector<81x81xf32>, vector<8x81xf32> -> vector<8x81xf32>
    %c1_86 = arith.constant 1 : index
    %c0_87 = arith.constant 0 : index
    %c0_88 = arith.constant 0 : index
    %119 = vector.load %arg2[%c1_86, %c0_87, %c0_88] : memref<2x81x81xf32, #tpu.memory_space<vmem>>, vector<1x81x81xf32>
    %120 = vector.shape_cast %119 : vector<1x81x81xf32> to vector<81x81xf32>
    %cst_89 = arith.constant dense<0.000000e+00> : vector<8x81xf32>
    %121 = tpu.matmul %114, %120, %cst_89 {dimension_numbers = #tpu.dot_dimension_numbers<[1], [0], [0], [1], [0, 0, 1, 1], [], []>} : vector<8x81xf32>, vector<81x81xf32>, vector<8x81xf32> -> vector<8x81xf32>
    %c1_90 = arith.constant 1 : index
    %c0_91 = arith.constant 0 : index
    %c0_92 = arith.constant 0 : index
    %122 = vector.load %arg18[%c1_90, %c0_91, %c0_92] : memref<9x8x1xf32, #tpu.memory_space<vmem>>, vector<1x8x1xf32>
    %123 = vector.shape_cast %122 : vector<1x8x1xf32> to vector<8x1xf32>
    %124 = vector.broadcast %123 : vector<8x1xf32> to vector<8x81xf32>
    %125 = arith.mulf %118, %124 : vector<8x81xf32>
    %c4_93 = arith.constant 4 : index
    %c0_94 = arith.constant 0 : index
    %c0_95 = arith.constant 0 : index
    %126 = vector.load %arg18[%c4_93, %c0_94, %c0_95] : memref<9x8x1xf32, #tpu.memory_space<vmem>>, vector<1x8x1xf32>
    %127 = vector.shape_cast %126 : vector<1x8x1xf32> to vector<8x1xf32>
    %128 = vector.broadcast %127 : vector<8x1xf32> to vector<8x81xf32>
    %129 = arith.mulf %114, %128 : vector<8x81xf32>
    %130 = arith.addf %125, %129 : vector<8x81xf32>
    %c7_96 = arith.constant 7 : index
    %c0_97 = arith.constant 0 : index
    %c0_98 = arith.constant 0 : index
    %131 = vector.load %arg18[%c7_96, %c0_97, %c0_98] : memref<9x8x1xf32, #tpu.memory_space<vmem>>, vector<1x8x1xf32>
    %132 = vector.shape_cast %131 : vector<1x8x1xf32> to vector<8x1xf32>
    %133 = vector.broadcast %132 : vector<8x1xf32> to vector<8x81xf32>
    %134 = arith.mulf %121, %133 : vector<8x81xf32>
    %135 = arith.addf %130, %134 : vector<8x81xf32>
    %c0_99 = arith.constant 0 : index
    %c0_100 = arith.constant 0 : index
    %c0_101 = arith.constant 0 : index
    %136 = vector.load %arg18[%c0_99, %c0_100, %c0_101] : memref<9x8x1xf32, #tpu.memory_space<vmem>>, vector<1x8x1xf32>
    %137 = vector.shape_cast %136 : vector<1x8x1xf32> to vector<8x1xf32>
    %138 = vector.broadcast %137 : vector<8x1xf32> to vector<8x81xf32>
    %139 = arith.mulf %118, %138 : vector<8x81xf32>
    %c3_102 = arith.constant 3 : index
    %c0_103 = arith.constant 0 : index
    %c0_104 = arith.constant 0 : index
    %140 = vector.load %arg18[%c3_102, %c0_103, %c0_104] : memref<9x8x1xf32, #tpu.memory_space<vmem>>, vector<1x8x1xf32>
    %141 = vector.shape_cast %140 : vector<1x8x1xf32> to vector<8x1xf32>
    %142 = vector.broadcast %141 : vector<8x1xf32> to vector<8x81xf32>
    %143 = arith.mulf %114, %142 : vector<8x81xf32>
    %144 = arith.addf %139, %143 : vector<8x81xf32>
    %c6_105 = arith.constant 6 : index
    %c0_106 = arith.constant 0 : index
    %c0_107 = arith.constant 0 : index
    %145 = vector.load %arg18[%c6_105, %c0_106, %c0_107] : memref<9x8x1xf32, #tpu.memory_space<vmem>>, vector<1x8x1xf32>
    %146 = vector.shape_cast %145 : vector<1x8x1xf32> to vector<8x1xf32>
    %147 = vector.broadcast %146 : vector<8x1xf32> to vector<8x81xf32>
    %148 = arith.mulf %121, %147 : vector<8x81xf32>
    %149 = arith.addf %144, %148 : vector<8x81xf32>
    %c0_108 = arith.constant 0 : index
    %c0_109 = arith.constant 0 : index
    %c0_110 = arith.constant 0 : index
    %150 = vector.load %arg3[%c0_108, %c0_109, %c0_110] : memref<2x81x81xf32, #tpu.memory_space<vmem>>, vector<1x81x81xf32>
    %151 = vector.shape_cast %150 : vector<1x81x81xf32> to vector<81x81xf32>
    %cst_111 = arith.constant dense<0.000000e+00> : vector<8x81xf32>
    %152 = tpu.matmul %149, %151, %cst_111 {dimension_numbers = #tpu.dot_dimension_numbers<[1], [0], [0], [1], [0, 0, 1, 1], [], []>} : vector<8x81xf32>, vector<81x81xf32>, vector<8x81xf32> -> vector<8x81xf32>
    %153 = arith.addf %135, %152 : vector<8x81xf32>
    %c2_112 = arith.constant 2 : index
    %c0_113 = arith.constant 0 : index
    %c0_114 = arith.constant 0 : index
    %154 = vector.load %arg18[%c2_112, %c0_113, %c0_114] : memref<9x8x1xf32, #tpu.memory_space<vmem>>, vector<1x8x1xf32>
    %155 = vector.shape_cast %154 : vector<1x8x1xf32> to vector<8x1xf32>
    %156 = vector.broadcast %155 : vector<8x1xf32> to vector<8x81xf32>
    %157 = arith.mulf %118, %156 : vector<8x81xf32>
    %c5_115 = arith.constant 5 : index
    %c0_116 = arith.constant 0 : index
    %c0_117 = arith.constant 0 : index
    %158 = vector.load %arg18[%c5_115, %c0_116, %c0_117] : memref<9x8x1xf32, #tpu.memory_space<vmem>>, vector<1x8x1xf32>
    %159 = vector.shape_cast %158 : vector<1x8x1xf32> to vector<8x1xf32>
    %160 = vector.broadcast %159 : vector<8x1xf32> to vector<8x81xf32>
    %161 = arith.mulf %114, %160 : vector<8x81xf32>
    %162 = arith.addf %157, %161 : vector<8x81xf32>
    %c8_118 = arith.constant 8 : index
    %c0_119 = arith.constant 0 : index
    %c0_120 = arith.constant 0 : index
    %163 = vector.load %arg18[%c8_118, %c0_119, %c0_120] : memref<9x8x1xf32, #tpu.memory_space<vmem>>, vector<1x8x1xf32>
    %164 = vector.shape_cast %163 : vector<1x8x1xf32> to vector<8x1xf32>
    %165 = vector.broadcast %164 : vector<8x1xf32> to vector<8x81xf32>
    %166 = arith.mulf %121, %165 : vector<8x81xf32>
    %167 = arith.addf %162, %166 : vector<8x81xf32>
    %c1_121 = arith.constant 1 : index
    %c0_122 = arith.constant 0 : index
    %c0_123 = arith.constant 0 : index
    %168 = vector.load %arg3[%c1_121, %c0_122, %c0_123] : memref<2x81x81xf32, #tpu.memory_space<vmem>>, vector<1x81x81xf32>
    %169 = vector.shape_cast %168 : vector<1x81x81xf32> to vector<81x81xf32>
    %cst_124 = arith.constant dense<0.000000e+00> : vector<8x81xf32>
    %170 = tpu.matmul %167, %169, %cst_124 {dimension_numbers = #tpu.dot_dimension_numbers<[1], [0], [0], [1], [0, 0, 1, 1], [], []>} : vector<8x81xf32>, vector<81x81xf32>, vector<8x81xf32> -> vector<8x81xf32>
    %171 = arith.addf %153, %170 : vector<8x81xf32>
    %172 = vector.broadcast %115 : vector<8x1xf32> to vector<8x81xf32>
    %173 = arith.addf %171, %172 : vector<8x81xf32>
    %174 = vector.extract_strided_slice %1 {offsets = [0, 0], sizes = [8, 81], strides = [1, 1]} : vector<16x81xf32> to vector<8x81xf32>
    %175 = arith.addf %114, %174 : vector<8x81xf32>
    %c0_125 = arith.constant 0 : index
    %c0_126 = arith.constant 0 : index
    %c0_127 = arith.constant 0 : index
    %176 = vector.load %arg20[%c0_125, %c0_126, %c0_127] : memref<1x16x81xf32, #tpu.memory_space<vmem>>, vector<1x8x81xf32>
    %177 = vector.shape_cast %176 : vector<1x8x81xf32> to vector<8x81xf32>
    %178 = vector.shape_cast %175 : vector<8x81xf32> to vector<1x8x81xf32>
    tpu.vector_store %arg20[%c0_125, %c0_126, %c0_127], %178 {strides = array<i32>} : memref<1x16x81xf32, #tpu.memory_space<vmem>>, vector<1x8x81xf32>,
    %179 = vector.extract_strided_slice %1 {offsets = [8, 0], sizes = [8, 81], strides = [1, 1]} : vector<16x81xf32> to vector<8x81xf32>
    %180 = arith.addf %173, %179 : vector<8x81xf32>
    %c0_128 = arith.constant 0 : index
    %c8_129 = arith.constant 8 : index
    %c0_130 = arith.constant 0 : index
    %181 = vector.load %arg20[%c0_128, %c8_129, %c0_130] : memref<1x16x81xf32, #tpu.memory_space<vmem>>, vector<1x8x81xf32>
    %182 = vector.shape_cast %181 : vector<1x8x81xf32> to vector<8x81xf32>
    %183 = vector.shape_cast %180 : vector<8x81xf32> to vector<1x8x81xf32>
    tpu.vector_store %arg20[%c0_128, %c8_129, %c0_130], %183 {strides = array<i32>} : memref<1x16x81xf32, #tpu.memory_space<vmem>>, vector<1x8x81xf32>,
    return
  }
  func.func @transform_0(%arg0: i32) -> (i32, i32, i32) {
    %c0_i32 = arith.constant 0 : i32
    %c0_i32_0 = arith.constant 0 : i32
    %c0_i32_1 = arith.constant 0 : i32
    return %arg0, %c0_i32, %c0_i32_0 : i32, i32, i32
  }
  func.func @transform_1(%arg0: i32) -> (i32, i32, i32) {
    %c0_i32 = arith.constant 0 : i32
    %c0_i32_0 = arith.constant 0 : i32
    %c0_i32_1 = arith.constant 0 : i32
    %c0_i32_2 = arith.constant 0 : i32
    return %c0_i32, %c0_i32_0, %c0_i32_1 : i32, i32, i32
  }
  func.func @transform_2(%arg0: i32) -> (i32, i32, i32) {
    %c0_i32 = arith.constant 0 : i32
    %c0_i32_0 = arith.constant 0 : i32
    %c0_i32_1 = arith.constant 0 : i32
    %c0_i32_2 = arith.constant 0 : i32
    return %c0_i32, %c0_i32_0, %c0_i32_1 : i32, i32, i32
  }
  func.func @transform_3(%arg0: i32) -> (i32, i32) {
    %c0_i32 = arith.constant 0 : i32
    %c0_i32_0 = arith.constant 0 : i32
    %c0_i32_1 = arith.constant 0 : i32
    return %c0_i32, %c0_i32_0 : i32, i32
  }
  func.func @transform_4(%arg0: i32) -> (i32, i32) {
    %c0_i32 = arith.constant 0 : i32
    %c0_i32_0 = arith.constant 0 : i32
    %c0_i32_1 = arith.constant 0 : i32
    return %c0_i32, %c0_i32_0 : i32, i32
  }
  func.func @transform_5(%arg0: i32) -> (i32, i32, i32) {
    %c0_i32 = arith.constant 0 : i32
    %c0_i32_0 = arith.constant 0 : i32
    %c0_i32_1 = arith.constant 0 : i32
    %c0_i32_2 = arith.constant 0 : i32
    return %c0_i32, %c0_i32_0, %c0_i32_1 : i32, i32, i32
  }
  func.func @transform_6(%arg0: i32) -> (i32, i32) {
    %c0_i32 = arith.constant 0 : i32
    %c0_i32_0 = arith.constant 0 : i32
    %c0_i32_1 = arith.constant 0 : i32
    return %c0_i32, %c0_i32_0 : i32, i32
  }
  func.func @transform_7(%arg0: i32) -> (i32, i32) {
    %c0_i32 = arith.constant 0 : i32
    %c0_i32_0 = arith.constant 0 : i32
    %c0_i32_1 = arith.constant 0 : i32
    return %c0_i32, %c0_i32_0 : i32, i32
  }
  func.func @transform_8(%arg0: i32) -> (i32, i32) {
    %c0_i32 = arith.constant 0 : i32
    %c0_i32_0 = arith.constant 0 : i32
    %c0_i32_1 = arith.constant 0 : i32
    return %c0_i32, %c0_i32_0 : i32, i32
  }
  func.func @transform_9(%arg0: i32) -> (i32, i32) {
    %c0_i32 = arith.constant 0 : i32
    %c0_i32_0 = arith.constant 0 : i32
    %c0_i32_1 = arith.constant 0 : i32
    return %c0_i32, %c0_i32_0 : i32, i32
  }
  func.func @transform_10(%arg0: i32) -> (i32, i32) {
    %c0_i32 = arith.constant 0 : i32
    %c0_i32_0 = arith.constant 0 : i32
    %c0_i32_1 = arith.constant 0 : i32
    return %c0_i32, %c0_i32_0 : i32, i32
  }
  func.func @transform_11(%arg0: i32) -> (i32, i32) {
    %c0_i32 = arith.constant 0 : i32
    %c0_i32_0 = arith.constant 0 : i32
    %c0_i32_1 = arith.constant 0 : i32
    return %c0_i32, %c0_i32_0 : i32, i32
  }
  func.func @transform_12(%arg0: i32) -> (i32, i32) {
    %c0_i32 = arith.constant 0 : i32
    %c0_i32_0 = arith.constant 0 : i32
    %c0_i32_1 = arith.constant 0 : i32
    return %c0_i32, %c0_i32_0 : i32, i32
  }
  func.func @transform_13(%arg0: i32) -> (i32, i32) {
    %c0_i32 = arith.constant 0 : i32
    %c0_i32_0 = arith.constant 0 : i32
    %c0_i32_1 = arith.constant 0 : i32
    return %c0_i32, %c0_i32_0 : i32, i32
  }
  func.func @transform_14(%arg0: i32) -> (i32, i32) {
    %c0_i32 = arith.constant 0 : i32
    %c0_i32_0 = arith.constant 0 : i32
    %c0_i32_1 = arith.constant 0 : i32
    return %c0_i32, %c0_i32_0 : i32, i32
  }
  func.func @transform_15(%arg0: i32) -> (i32, i32) {
    %c0_i32 = arith.constant 0 : i32
    %c0_i32_0 = arith.constant 0 : i32
    %c0_i32_1 = arith.constant 0 : i32
    return %c0_i32, %c0_i32_0 : i32, i32
  }
  func.func @transform_16(%arg0: i32) -> (i32, i32) {
    %c0_i32 = arith.constant 0 : i32
    %c0_i32_0 = arith.constant 0 : i32
    %c0_i32_1 = arith.constant 0 : i32
    return %c0_i32, %c0_i32_0 : i32, i32
  }
  func.func @transform_17(%arg0: i32) -> (i32, i32, i32) {
    %c0_i32 = arith.constant 0 : i32
    %c0_i32_0 = arith.constant 0 : i32
    %c0_i32_1 = arith.constant 0 : i32
    %c0_i32_2 = arith.constant 0 : i32
    return %c0_i32, %c0_i32_0, %c0_i32_1 : i32, i32, i32
  }
  func.func @transform_18(%arg0: i32) -> (i32, i32) {
    %c0_i32 = arith.constant 0 : i32
    %c0_i32_0 = arith.constant 0 : i32
    %c0_i32_1 = arith.constant 0 : i32
    return %c0_i32, %c0_i32_0 : i32, i32
  }
  func.func @transform_19(%arg0: i32) -> (i32, i32, i32) {
    %c0_i32 = arith.constant 0 : i32
    %c0_i32_0 = arith.constant 0 : i32
    %c0_i32_1 = arith.constant 0 : i32
    return %arg0, %c0_i32, %c0_i32_0 : i32, i32, i32
  }
}

</mosaic_0001>

<llo_original>
// kernel: tpu_custom_call.1
$region0: #{tpu_custom_call.1}
  #allocation0 [shape = 'u32[]', space=smem, size = 0x4, offset = 0x4, fixed_abs, tag = 'smem constant byte address 0x4 - core index']
  #allocation1 [shape = 'u32[144,128]{1,0:T(1,128)}', space=vmem, size = 0x12000, scoped, tag = 'internal scratch']
  %s0 = inlined_call_operand.vmem [shape: f32[2,16,81], index: 0, kind: input, shape index: {}]
  %s1 = inlined_call_operand.vmem [shape: f32[2,81,81], index: 1, kind: input, shape index: {}]
  %s2 = inlined_call_operand.vmem [shape: f32[2,81,81], index: 2, kind: input, shape index: {}]
  %s3 = inlined_call_operand.vmem [shape: f32[16,16], index: 3, kind: input, shape index: {}]
  %s4 = inlined_call_operand.vmem [shape: f32[16,1], index: 4, kind: input, shape index: {}]
  %s5 = inlined_call_operand.vmem [shape: f32[9,16,1], index: 5, kind: input, shape index: {}]
  %s6 = inlined_call_operand.vmem [shape: f32[16,1], index: 6, kind: input, shape index: {}]
  %s7 = inlined_call_operand.vmem [shape: f32[8,16], index: 7, kind: input, shape index: {}]
  %s8 = inlined_call_operand.vmem [shape: f32[8,16], index: 8, kind: input, shape index: {}]
  %s9 = inlined_call_operand.vmem [shape: f32[8,1], index: 9, kind: input, shape index: {}]
  %s10 = inlined_call_operand.vmem [shape: f32[16,8], index: 10, kind: input, shape index: {}]
  %s11 = inlined_call_operand.vmem [shape: f32[16,1], index: 11, kind: input, shape index: {}]
  %s12 = inlined_call_operand.vmem [shape: f32[16,8], index: 12, kind: input, shape index: {}]
  %s13 = inlined_call_operand.vmem [shape: f32[16,1], index: 13, kind: input, shape index: {}]
  %s14 = inlined_call_operand.vmem [shape: f32[8,16], index: 14, kind: input, shape index: {}]
  %s15 = inlined_call_operand.vmem [shape: f32[8,16], index: 15, kind: input, shape index: {}]
  %s16 = inlined_call_operand.vmem [shape: f32[8,1], index: 16, kind: input, shape index: {}]
  %s17 = inlined_call_operand.vmem [shape: f32[9,8,1], index: 17, kind: input, shape index: {}]
  %s18 = inlined_call_operand.vmem [shape: f32[8,1], index: 18, kind: input, shape index: {}]
  %s19 = inlined_call_operand.hbm [shape: f32[2,16,81], index: 19, kind: output, shape index: {}]
  %s20 = sld [smem:[#allocation0]]
  $region109: #{tpu_custom_call.1} parent=0
    _
  %s22 = ssub.s32 1, %s20
  %s23 = scalar_select 0, %s22, %s20
  $region1: #{tpu_custom_call.1} parent=0
    #allocation2 [shape = 'u8[16384]{0}', space=vmem, size = 0x4000, scoped, tag = 'output window, operand 0']
    #allocation3 [shape = 's32[2]{0}', space=sflag, size = 0x8, scoped, tag = 'scoped memory for tpu_custom_call.1']
    %24 = vsyncpa [#allocation3], 0
    %s25 = scalar_lea.sflag [#allocation3], 1
    %26 = vsyncpa %s25, 0
    loop: start=0, step=1, limit=4
    $region2: #{tpu_custom_call.1} parent=1 // loop_pre_header
      _
    $region3: #{tpu_custom_call.1} parent=1 // loop_header
      %s28 = sphi 0, %s32
      %p29 = scmp.ge.s32.totalorder %s28, 4
      %s38 = sphi 0, %s40
      %s41 = sphi 0, %s38
      %s42 = sphi 0, %s41
      %s58 = sphi 0, %s42
      %s62 = sphi 0, %s62
      %s64 = sphi 0, %s62
      %s65 = sphi 0, %s64
      %s79 = sphi 0, %s65
      %s83 = sphi 0, %s83
      %s85 = sphi 0, %s83
      %s86 = sphi 0, %s85
      %s100 = sphi 0, %s86
      %s104 = sphi 0, %s104
      %s106 = sphi 0, %s104
      %s107 = sphi 0, %s106
      %s121 = sphi 0, %s107
      %s125 = sphi 0, %s125
      %s127 = sphi 0, %s125
      %s128 = sphi 0, %s127
      %s142 = sphi 0, %s128
      %s146 = sphi 0, %s146
      %s148 = sphi 0, %s146
      %s149 = sphi 0, %s148
      %s163 = sphi 0, %s149
      %s167 = sphi 0, %s167
      %s169 = sphi 0, %s167
      %s170 = sphi 0, %s169
      %s184 = sphi 0, %s170
      %s188 = sphi 0, %s188
      %s190 = sphi 0, %s188
      %s191 = sphi 0, %s190
      %s205 = sphi 0, %s191
      %s209 = sphi 0, %s209
      %s211 = sphi 0, %s209
      %s212 = sphi 0, %s211
      %s226 = sphi 0, %s212
      %s230 = sphi 0, %s230
      %s232 = sphi 0, %s230
      %s233 = sphi 0, %s232
      %s247 = sphi 0, %s233
      %s251 = sphi 0, %s251
      %s253 = sphi 0, %s251
      %s254 = sphi 0, %s253
      %s268 = sphi 0, %s254
      %s272 = sphi 0, %s272
      %s274 = sphi 0, %s272
      %s275 = sphi 0, %s274
      %s289 = sphi 0, %s275
      %s293 = sphi 0, %s293
      %s295 = sphi 0, %s293
      %s296 = sphi 0, %s295
      %s310 = sphi 0, %s296
      %s314 = sphi 0, %s314
      %s316 = sphi 0, %s314
      %s317 = sphi 0, %s316
      %s331 = sphi 0, %s317
      %s335 = sphi 0, %s335
      %s337 = sphi 0, %s335
      %s338 = sphi 0, %s337
      %s352 = sphi 0, %s338
      %s356 = sphi 0, %s356
      %s358 = sphi 0, %s356
      %s359 = sphi 0, %s358
      %s373 = sphi 0, %s359
      %s377 = sphi 0, %s377
      %s379 = sphi 0, %s377
      %s380 = sphi 0, %s379
      %s394 = sphi 0, %s380
      %s398 = sphi 0, %s398
      %s400 = sphi 0, %s398
      %s401 = sphi 0, %s400
      %s415 = sphi 0, %s401
      %s419 = sphi 0, %s419
      %s421 = sphi 0, %s419
      %s422 = sphi 0, %s421
      %s436 = sphi 0, %s422
      %s442 = sphi 0, %s444
      %s445 = sphi 0, %s442
      %s446 = sphi 0, %s445
      %s462 = sphi 0, %s446
    $region4: #{tpu_custom_call.1} parent=1 // loop_header_branch
      %31 = sbr.rel (%p29) target = $region8
    $region5: #{tpu_custom_call.1} parent=1 // loop_body
      %s33 = ssub.s32 %s28, 1
      %s34 = ssub.s32 %s28, 2
      %s35 = sadd.s32 %s28, 1
      %s36 = ssub.s32 %s28, %s35
      %p37 = scmp.eq.s32.totalorder %s36, 0
      %s39 = sadd.s32 %s38, 1
      %s40 = scalar_select %p37, %s38, %s39
      %p43 = pneg %p37
      %p44 = scmp.eq.s32.totalorder %s28, 1
      %p45 = por %p43, %p44
      %p46 = scmp.ne.s32.totalorder %s38, %s41
      %p47 = scmp.eq.s32.totalorder %s28, 0
      %p48 = por %p46, %p47
      %p49 = scmp.ne.s32.totalorder %s38, %s41
      %p50 = scmp.eq.s32.totalorder %s33, 1
      %p51 = por %p49, %p50
      %p52 = scmp.ne.s32.totalorder %s41, %s42
      %p53 = scmp.eq.s32.totalorder %s33, 0
      %p54 = por %p52, %p53
      %p55 = scmp.ne.s32.totalorder %s41, %s42
      %p56 = scmp.eq.s32.totalorder %s34, 1
      %p57 = por %p55, %p56
      %p59 = scmp.ne.s32.totalorder %s42, %s58
      %p60 = scmp.eq.s32.totalorder %s34, 0
      %p61 = por %p59, %p60
      %s63 = sadd.s32 %s62, 1
      %p66 = scmp.eq.s32.totalorder %s28, 1
      %p67 = scmp.ne.s32.totalorder %s62, %s64
      %p68 = scmp.eq.s32.totalorder %s28, 0
      %p69 = por %p67, %p68
      %p70 = scmp.ne.s32.totalorder %s62, %s64
      %p71 = scmp.eq.s32.totalorder %s33, 1
      %p72 = por %p70, %p71
      %p73 = scmp.ne.s32.totalorder %s64, %s65
      %p74 = scmp.eq.s32.totalorder %s33, 0
      %p75 = por %p73, %p74
      %p76 = scmp.ne.s32.totalorder %s64, %s65
      %p77 = scmp.eq.s32.totalorder %s34, 1
      %p78 = por %p76, %p77
      %p80 = scmp.ne.s32.totalorder %s65, %s79
      %p81 = scmp.eq.s32.totalorder %s34, 0
      %p82 = por %p80, %p81
      %s84 = sadd.s32 %s83, 1
      %p87 = scmp.eq.s32.totalorder %s28, 1
      %p88 = scmp.ne.s32.totalorder %s83, %s85
      %p89 = scmp.eq.s32.totalorder %s28, 0
      %p90 = por %p88, %p89
      %p91 = scmp.ne.s32.totalorder %s83, %s85
      %p92 = scmp.eq.s32.totalorder %s33, 1
      %p93 = por %p91, %p92
      %p94 = scmp.ne.s32.totalorder %s85, %s86
      %p95 = scmp.eq.s32.totalorder %s33, 0
      %p96 = por %p94, %p95
      %p97 = scmp.ne.s32.totalorder %s85, %s86
      %p98 = scmp.eq.s32.totalorder %s34, 1
      %p99 = por %p97, %p98
      %p101 = scmp.ne.s32.totalorder %s86, %s100
      %p102 = scmp.eq.s32.totalorder %s34, 0
      %p103 = por %p101, %p102
      %s105 = sadd.s32 %s104, 1
      %p108 = scmp.eq.s32.totalorder %s28, 1
      %p109 = scmp.ne.s32.totalorder %s104, %s106
      %p110 = scmp.eq.s32.totalorder %s28, 0
      %p111 = por %p109, %p110
      %p112 = scmp.ne.s32.totalorder %s104, %s106
      %p113 = scmp.eq.s32.totalorder %s33, 1
      %p114 = por %p112, %p113
      %p115 = scmp.ne.s32.totalorder %s106, %s107
      %p116 = scmp.eq.s32.totalorder %s33, 0
      %p117 = por %p115, %p116
      %p118 = scmp.ne.s32.totalorder %s106, %s107
      %p119 = scmp.eq.s32.totalorder %s34, 1
      %p120 = por %p118, %p119
      %p122 = scmp.ne.s32.totalorder %s107, %s121
      %p123 = scmp.eq.s32.totalorder %s34, 0
      %p124 = por %p122, %p123
      %s126 = sadd.s32 %s125, 1
      %p129 = scmp.eq.s32.totalorder %s28, 1
      %p130 = scmp.ne.s32.totalorder %s125, %s127
      %p131 = scmp.eq.s32.totalorder %s28, 0
      %p132 = por %p130, %p131
      %p133 = scmp.ne.s32.totalorder %s125, %s127
      %p134 = scmp.eq.s32.totalorder %s33, 1
      %p135 = por %p133, %p134
      %p136 = scmp.ne.s32.totalorder %s127, %s128
      %p137 = scmp.eq.s32.totalorder %s33, 0
      %p138 = por %p136, %p137
      %p139 = scmp.ne.s32.totalorder %s127, %s128
      %p140 = scmp.eq.s32.totalorder %s34, 1
      %p141 = por %p139, %p140
      %p143 = scmp.ne.s32.totalorder %s128, %s142
      %p144 = scmp.eq.s32.totalorder %s34, 0
      %p145 = por %p143, %p144
      %s147 = sadd.s32 %s146, 1
      %p150 = scmp.eq.s32.totalorder %s28, 1
      %p151 = scmp.ne.s32.totalorder %s146, %s148
      %p152 = scmp.eq.s32.totalorder %s28, 0
      %p153 = por %p151, %p152
      %p154 = scmp.ne.s32.totalorder %s146, %s148
      %p155 = scmp.eq.s32.totalorder %s33, 1
      %p156 = por %p154, %p155
      %p157 = scmp.ne.s32.totalorder %s148, %s149
      %p158 = scmp.eq.s32.totalorder %s33, 0
      %p159 = por %p157, %p158
      %p160 = scmp.ne.s32.totalorder %s148, %s149
      %p161 = scmp.eq.s32.totalorder %s34, 1
      %p162 = por %p160, %p161
      %p164 = scmp.ne.s32.totalorder %s149, %s163
      %p165 = scmp.eq.s32.totalorder %s34, 0
      %p166 = por %p164, %p165
      %s168 = sadd.s32 %s167, 1
      %p171 = scmp.eq.s32.totalorder %s28, 1
      %p172 = scmp.ne.s32.totalorder %s167, %s169
      %p173 = scmp.eq.s32.totalorder %s28, 0
      %p174 = por %p172, %p173
      %p175 = scmp.ne.s32.totalorder %s167, %s169
      %p176 = scmp.eq.s32.totalorder %s33, 1
      %p177 = por %p175, %p176
      %p178 = scmp.ne.s32.totalorder %s169, %s170
      %p179 = scmp.eq.s32.totalorder %s33, 0
      %p180 = por %p178, %p179
      %p181 = scmp.ne.s32.totalorder %s169, %s170
      %p182 = scmp.eq.s32.totalorder %s34, 1
      %p183 = por %p181, %p182
      %p185 = scmp.ne.s32.totalorder %s170, %s184
      %p186 = scmp.eq.s32.totalorder %s34, 0
      %p187 = por %p185, %p186
      %s189 = sadd.s32 %s188, 1
      %p192 = scmp.eq.s32.totalorder %s28, 1
      %p193 = scmp.ne.s32.totalorder %s188, %s190
      %p194 = scmp.eq.s32.totalorder %s28, 0
      %p195 = por %p193, %p194
      %p196 = scmp.ne.s32.totalorder %s188, %s190
      %p197 = scmp.eq.s32.totalorder %s33, 1
      %p198 = por %p196, %p197
      %p199 = scmp.ne.s32.totalorder %s190, %s191
      %p200 = scmp.eq.s32.totalorder %s33, 0
      %p201 = por %p199, %p200
      %p202 = scmp.ne.s32.totalorder %s190, %s191
      %p203 = scmp.eq.s32.totalorder %s34, 1
      %p204 = por %p202, %p203
      %p206 = scmp.ne.s32.totalorder %s191, %s205
      %p207 = scmp.eq.s32.totalorder %s34, 0
      %p208 = por %p206, %p207
      %s210 = sadd.s32 %s209, 1
      %p213 = scmp.eq.s32.totalorder %s28, 1
      %p214 = scmp.ne.s32.totalorder %s209, %s211
      %p215 = scmp.eq.s32.totalorder %s28, 0
      %p216 = por %p214, %p215
      %p217 = scmp.ne.s32.totalorder %s209, %s211
      %p218 = scmp.eq.s32.totalorder %s33, 1
      %p219 = por %p217, %p218
      %p220 = scmp.ne.s32.totalorder %s211, %s212
      %p221 = scmp.eq.s32.totalorder %s33, 0
      %p222 = por %p220, %p221
      %p223 = scmp.ne.s32.totalorder %s211, %s212
      %p224 = scmp.eq.s32.totalorder %s34, 1
      %p225 = por %p223, %p224
      %p227 = scmp.ne.s32.totalorder %s212, %s226
      %p228 = scmp.eq.s32.totalorder %s34, 0
      %p229 = por %p227, %p228
      %s231 = sadd.s32 %s230, 1
      %p234 = scmp.eq.s32.totalorder %s28, 1
      %p235 = scmp.ne.s32.totalorder %s230, %s232
      %p236 = scmp.eq.s32.totalorder %s28, 0
      %p237 = por %p235, %p236
      %p238 = scmp.ne.s32.totalorder %s230, %s232
      %p239 = scmp.eq.s32.totalorder %s33, 1
      %p240 = por %p238, %p239
      %p241 = scmp.ne.s32.totalorder %s232, %s233
      %p242 = scmp.eq.s32.totalorder %s33, 0
      %p243 = por %p241, %p242
      %p244 = scmp.ne.s32.totalorder %s232, %s233
      %p245 = scmp.eq.s32.totalorder %s34, 1
      %p246 = por %p244, %p245
      %p248 = scmp.ne.s32.totalorder %s233, %s247
      %p249 = scmp.eq.s32.totalorder %s34, 0
      %p250 = por %p248, %p249
      %s252 = sadd.s32 %s251, 1
      %p255 = scmp.eq.s32.totalorder %s28, 1
      %p256 = scmp.ne.s32.totalorder %s251, %s253
      %p257 = scmp.eq.s32.totalorder %s28, 0
      %p258 = por %p256, %p257
      %p259 = scmp.ne.s32.totalorder %s251, %s253
      %p260 = scmp.eq.s32.totalorder %s33, 1
      %p261 = por %p259, %p260
      %p262 = scmp.ne.s32.totalorder %s253, %s254
      %p263 = scmp.eq.s32.totalorder %s33, 0
      %p264 = por %p262, %p263
      %p265 = scmp.ne.s32.totalorder %s253, %s254
      %p266 = scmp.eq.s32.totalorder %s34, 1
      %p267 = por %p265, %p266
      %p269 = scmp.ne.s32.totalorder %s254, %s268
      %p270 = scmp.eq.s32.totalorder %s34, 0
      %p271 = por %p269, %p270
      %s273 = sadd.s32 %s272, 1
      %p276 = scmp.eq.s32.totalorder %s28, 1
      %p277 = scmp.ne.s32.totalorder %s272, %s274
      %p278 = scmp.eq.s32.totalorder %s28, 0
      %p279 = por %p277, %p278
      %p280 = scmp.ne.s32.totalorder %s272, %s274
      %p281 = scmp.eq.s32.totalorder %s33, 1
      %p282 = por %p280, %p281
      %p283 = scmp.ne.s32.totalorder %s274, %s275
      %p284 = scmp.eq.s32.totalorder %s33, 0
      %p285 = por %p283, %p284
      %p286 = scmp.ne.s32.totalorder %s274, %s275
      %p287 = scmp.eq.s32.totalorder %s34, 1
      %p288 = por %p286, %p287
      %p290 = scmp.ne.s32.totalorder %s275, %s289
      %p291 = scmp.eq.s32.totalorder %s34, 0
      %p292 = por %p290, %p291
      %s294 = sadd.s32 %s293, 1
      %p297 = scmp.eq.s32.totalorder %s28, 1
      %p298 = scmp.ne.s32.totalorder %s293, %s295
      %p299 = scmp.eq.s32.totalorder %s28, 0
      %p300 = por %p298, %p299
      %p301 = scmp.ne.s32.totalorder %s293, %s295
      %p302 = scmp.eq.s32.totalorder %s33, 1
      %p303 = por %p301, %p302
      %p304 = scmp.ne.s32.totalorder %s295, %s296
      %p305 = scmp.eq.s32.totalorder %s33, 0
      %p306 = por %p304, %p305
      %p307 = scmp.ne.s32.totalorder %s295, %s296
      %p308 = scmp.eq.s32.totalorder %s34, 1
      %p309 = por %p307, %p308
      %p311 = scmp.ne.s32.totalorder %s296, %s310
      %p312 = scmp.eq.s32.totalorder %s34, 0
      %p313 = por %p311, %p312
      %s315 = sadd.s32 %s314, 1
      %p318 = scmp.eq.s32.totalorder %s28, 1
      %p319 = scmp.ne.s32.totalorder %s314, %s316
      %p320 = scmp.eq.s32.totalorder %s28, 0
      %p321 = por %p319, %p320
      %p322 = scmp.ne.s32.totalorder %s314, %s316
      %p323 = scmp.eq.s32.totalorder %s33, 1
      %p324 = por %p322, %p323
      %p325 = scmp.ne.s32.totalorder %s316, %s317
      %p326 = scmp.eq.s32.totalorder %s33, 0
      %p327 = por %p325, %p326
      %p328 = scmp.ne.s32.totalorder %s316, %s317
      %p329 = scmp.eq.s32.totalorder %s34, 1
      %p330 = por %p328, %p329
      %p332 = scmp.ne.s32.totalorder %s317, %s331
      %p333 = scmp.eq.s32.totalorder %s34, 0
      %p334 = por %p332, %p333
      %s336 = sadd.s32 %s335, 1
      %p339 = scmp.eq.s32.totalorder %s28, 1
      %p340 = scmp.ne.s32.totalorder %s335, %s337
      %p341 = scmp.eq.s32.totalorder %s28, 0
      %p342 = por %p340, %p341
      %p343 = scmp.ne.s32.totalorder %s335, %s337
      %p344 = scmp.eq.s32.totalorder %s33, 1
      %p345 = por %p343, %p344
      %p346 = scmp.ne.s32.totalorder %s337, %s338
      %p347 = scmp.eq.s32.totalorder %s33, 0
      %p348 = por %p346, %p347
      %p349 = scmp.ne.s32.totalorder %s337, %s338
      %p350 = scmp.eq.s32.totalorder %s34, 1
      %p351 = por %p349, %p350
      %p353 = scmp.ne.s32.totalorder %s338, %s352
      %p354 = scmp.eq.s32.totalorder %s34, 0
      %p355 = por %p353, %p354
      %s357 = sadd.s32 %s356, 1
      %p360 = scmp.eq.s32.totalorder %s28, 1
      %p361 = scmp.ne.s32.totalorder %s356, %s358
      %p362 = scmp.eq.s32.totalorder %s28, 0
      %p363 = por %p361, %p362
      %p364 = scmp.ne.s32.totalorder %s356, %s358
      %p365 = scmp.eq.s32.totalorder %s33, 1
      %p366 = por %p364, %p365
      %p367 = scmp.ne.s32.totalorder %s358, %s359
      %p368 = scmp.eq.s32.totalorder %s33, 0
      %p369 = por %p367, %p368
      %p370 = scmp.ne.s32.totalorder %s358, %s359
      %p371 = scmp.eq.s32.totalorder %s34, 1
      %p372 = por %p370, %p371
      %p374 = scmp.ne.s32.totalorder %s359, %s373
      %p375 = scmp.eq.s32.totalorder %s34, 0
      %p376 = por %p374, %p375
      %s378 = sadd.s32 %s377, 1
      %p381 = scmp.eq.s32.totalorder %s28, 1
      %p382 = scmp.ne.s32.totalorder %s377, %s379
      %p383 = scmp.eq.s32.totalorder %s28, 0
      %p384 = por %p382, %p383
      %p385 = scmp.ne.s32.totalorder %s377, %s379
      %p386 = scmp.eq.s32.totalorder %s33, 1
      %p387 = por %p385, %p386
      %p388 = scmp.ne.s32.totalorder %s379, %s380
      %p389 = scmp.eq.s32.totalorder %s33, 0
      %p390 = por %p388, %p389
      %p391 = scmp.ne.s32.totalorder %s379, %s380
      %p392 = scmp.eq.s32.totalorder %s34, 1
      %p393 = por %p391, %p392
      %p395 = scmp.ne.s32.totalorder %s380, %s394
      %p396 = scmp.eq.s32.totalorder %s34, 0
      %p397 = por %p395, %p396
      %s399 = sadd.s32 %s398, 1
      %p402 = scmp.eq.s32.totalorder %s28, 1
      %p403 = scmp.ne.s32.totalorder %s398, %s400
      %p404 = scmp.eq.s32.totalorder %s28, 0
      %p405 = por %p403, %p404
      %p406 = scmp.ne.s32.totalorder %s398, %s400
      %p407 = scmp.eq.s32.totalorder %s33, 1
      %p408 = por %p406, %p407
      %p409 = scmp.ne.s32.totalorder %s400, %s401
      %p410 = scmp.eq.s32.totalorder %s33, 0
      %p411 = por %p409, %p410
      %p412 = scmp.ne.s32.totalorder %s400, %s401
      %p413 = scmp.eq.s32.totalorder %s34, 1
      %p414 = por %p412, %p413
      %p416 = scmp.ne.s32.totalorder %s401, %s415
      %p417 = scmp.eq.s32.totalorder %s34, 0
      %p418 = por %p416, %p417
      %s420 = sadd.s32 %s419, 1
      %p423 = scmp.eq.s32.totalorder %s28, 1
      %p424 = scmp.ne.s32.totalorder %s419, %s421
      %p425 = scmp.eq.s32.totalorder %s28, 0
      %p426 = por %p424, %p425
      %p427 = scmp.ne.s32.totalorder %s419, %s421
      %p428 = scmp.eq.s32.totalorder %s33, 1
      %p429 = por %p427, %p428
      %p430 = scmp.ne.s32.totalorder %s421, %s422
      %p431 = scmp.eq.s32.totalorder %s33, 0
      %p432 = por %p430, %p431
      %p433 = scmp.ne.s32.totalorder %s421, %s422
      %p434 = scmp.eq.s32.totalorder %s34, 1
      %p435 = por %p433, %p434
      %p437 = scmp.ne.s32.totalorder %s422, %s436
      %p438 = scmp.eq.s32.totalorder %s34, 0
      %p439 = por %p437, %p438
      %s440 = ssub.s32 %s28, %s35
      %p441 = scmp.eq.s32.totalorder %s440, 0
      %s443 = sadd.s32 %s442, 1
      %s444 = scalar_select %p441, %s442, %s443
      %p447 = pneg %p441
      %p448 = scmp.eq.s32.totalorder %s28, 1
      %p449 = por %p447, %p448
      %p450 = scmp.ne.s32.totalorder %s442, %s445
      %p451 = scmp.eq.s32.totalorder %s28, 0
      %p452 = por %p450, %p451
      %p453 = scmp.ne.s32.totalorder %s442, %s445
      %p454 = scmp.eq.s32.totalorder %s33, 1
      %p455 = por %p453, %p454
      %p456 = scmp.ne.s32.totalorder %s445, %s446
      %p457 = scmp.eq.s32.totalorder %s33, 0
      %p458 = por %p456, %p457
      %p459 = scmp.ne.s32.totalorder %s445, %s446
      %p460 = scmp.eq.s32.totalorder %s34, 1
      %p461 = por %p459, %p460
      %p463 = scmp.ne.s32.totalorder %s446, %s462
      %p464 = scmp.eq.s32.totalorder %s34, 0
      %p465 = por %p463, %p464
      %p466 = scmp.le.s32.totalorder 1, %s28
      %p467 = scmp.lt.s32.totalorder %s28, 3
      %p468 = pnand %p466, %p467
      %p469 = pneg %p468
      // Predicated region
      $region9: #{tpu_custom_call.1} parent=5 // pred_check
        _
      $region10: #{tpu_custom_call.1} parent=5 // pred_check_branch
        %471 = sbr.rel (%p468) target = $region12
      $region11: #{tpu_custom_call.1} parent=5 // pred_region
        %s472 = ssub.s32 %s28, 1
        // Predicated region
        $region13: #{tpu_custom_call.1} parent=11 // pred_check
          %p473 = pneg %p75
        $region14: #{tpu_custom_call.1} parent=11 // pred_check_branch
          %475 = sbr.rel (%p473) target = $region16
        $region15: #{tpu_custom_call.1} parent=11 // pred_region
          _
        $region16: #{tpu_custom_call.1} parent=11 // pred_fallthru
          _
        // Predicated region
        $region17: #{tpu_custom_call.1} parent=11 // pred_check
          %p476 = pneg %p96
        $region18: #{tpu_custom_call.1} parent=11 // pred_check_branch
          %478 = sbr.rel (%p476) target = $region20
        $region19: #{tpu_custom_call.1} parent=11 // pred_region
          _
        $region20: #{tpu_custom_call.1} parent=11 // pred_fallthru
          _
        // Predicated region
        $region21: #{tpu_custom_call.1} parent=11 // pred_check
          %p479 = pneg %p117
        $region22: #{tpu_custom_call.1} parent=11 // pred_check_branch
          %481 = sbr.rel (%p479) target = $region24
        $region23: #{tpu_custom_call.1} parent=11 // pred_region
          _
        $region24: #{tpu_custom_call.1} parent=11 // pred_fallthru
          _
        // Predicated region
        $region25: #{tpu_custom_call.1} parent=11 // pred_check
          %p482 = pneg %p138
        $region26: #{tpu_custom_call.1} parent=11 // pred_check_branch
          %484 = sbr.rel (%p482) target = $region28
        $region27: #{tpu_custom_call.1} parent=11 // pred_region
          _
        $region28: #{tpu_custom_call.1} parent=11 // pred_fallthru
          _
        // Predicated region
        $region29: #{tpu_custom_call.1} parent=11 // pred_check
          %p485 = pneg %p159
        $region30: #{tpu_custom_call.1} parent=11 // pred_check_branch
          %487 = sbr.rel (%p485) target = $region32
        $region31: #{tpu_custom_call.1} parent=11 // pred_region
          _
        $region32: #{tpu_custom_call.1} parent=11 // pred_fallthru
          _
        // Predicated region
        $region33: #{tpu_custom_call.1} parent=11 // pred_check
          %p488 = pneg %p180
        $region34: #{tpu_custom_call.1} parent=11 // pred_check_branch
          %490 = sbr.rel (%p488) target = $region36
        $region35: #{tpu_custom_call.1} parent=11 // pred_region
          _
        $region36: #{tpu_custom_call.1} parent=11 // pred_fallthru
          _
        // Predicated region
        $region37: #{tpu_custom_call.1} parent=11 // pred_check
          %p491 = pneg %p201
        $region38: #{tpu_custom_call.1} parent=11 // pred_check_branch
          %493 = sbr.rel (%p491) target = $region40
        $region39: #{tpu_custom_call.1} parent=11 // pred_region
          _
        $region40: #{tpu_custom_call.1} parent=11 // pred_fallthru
          _
        // Predicated region
        $region41: #{tpu_custom_call.1} parent=11 // pred_check
          %p494 = pneg %p222
        $region42: #{tpu_custom_call.1} parent=11 // pred_check_branch
          %496 = sbr.rel (%p494) target = $region44
        $region43: #{tpu_custom_call.1} parent=11 // pred_region
          _
        $region44: #{tpu_custom_call.1} parent=11 // pred_fallthru
          _
        // Predicated region
        $region45: #{tpu_custom_call.1} parent=11 // pred_check
          %p497 = pneg %p243
        $region46: #{tpu_custom_call.1} parent=11 // pred_check_branch
          %499 = sbr.rel (%p497) target = $region48
        $region47: #{tpu_custom_call.1} parent=11 // pred_region
          _
        $region48: #{tpu_custom_call.1} parent=11 // pred_fallthru
          _
        // Predicated region
        $region49: #{tpu_custom_call.1} parent=11 // pred_check
          %p500 = pneg %p264
        $region50: #{tpu_custom_call.1} parent=11 // pred_check_branch
          %502 = sbr.rel (%p500) target = $region52
        $region51: #{tpu_custom_call.1} parent=11 // pred_region
          _
        $region52: #{tpu_custom_call.1} parent=11 // pred_fallthru
          _
        // Predicated region
        $region53: #{tpu_custom_call.1} parent=11 // pred_check
          %p503 = pneg %p285
        $region54: #{tpu_custom_call.1} parent=11 // pred_check_branch
          %505 = sbr.rel (%p503) target = $region56
        $region55: #{tpu_custom_call.1} parent=11 // pred_region
          _
        $region56: #{tpu_custom_call.1} parent=11 // pred_fallthru
          _
        // Predicated region
        $region57: #{tpu_custom_call.1} parent=11 // pred_check
          %p506 = pneg %p306
        $region58: #{tpu_custom_call.1} parent=11 // pred_check_branch
          %508 = sbr.rel (%p506) target = $region60
        $region59: #{tpu_custom_call.1} parent=11 // pred_region
          _
        $region60: #{tpu_custom_call.1} parent=11 // pred_fallthru
          _
        // Predicated region
        $region61: #{tpu_custom_call.1} parent=11 // pred_check
          %p509 = pneg %p327
        $region62: #{tpu_custom_call.1} parent=11 // pred_check_branch
          %511 = sbr.rel (%p509) target = $region64
        $region63: #{tpu_custom_call.1} parent=11 // pred_region
          _
        $region64: #{tpu_custom_call.1} parent=11 // pred_fallthru
          _
        // Predicated region
        $region65: #{tpu_custom_call.1} parent=11 // pred_check
          %p512 = pneg %p348
        $region66: #{tpu_custom_call.1} parent=11 // pred_check_branch
          %514 = sbr.rel (%p512) target = $region68
        $region67: #{tpu_custom_call.1} parent=11 // pred_region
          _
        $region68: #{tpu_custom_call.1} parent=11 // pred_fallthru
          _
        // Predicated region
        $region69: #{tpu_custom_call.1} parent=11 // pred_check
          %p515 = pneg %p369
        $region70: #{tpu_custom_call.1} parent=11 // pred_check_branch
          %517 = sbr.rel (%p515) target = $region72
        $region71: #{tpu_custom_call.1} parent=11 // pred_region
          _
        $region72: #{tpu_custom_call.1} parent=11 // pred_fallthru
          _
        // Predicated region
        $region73: #{tpu_custom_call.1} parent=11 // pred_check
          %p518 = pneg %p390
        $region74: #{tpu_custom_call.1} parent=11 // pred_check_branch
          %520 = sbr.rel (%p518) target = $region76
        $region75: #{tpu_custom_call.1} parent=11 // pred_region
          _
        $region76: #{tpu_custom_call.1} parent=11 // pred_fallthru
          _
        // Predicated region
        $region77: #{tpu_custom_call.1} parent=11 // pred_check
          %p521 = pneg %p411
        $region78: #{tpu_custom_call.1} parent=11 // pred_check_branch
          %523 = sbr.rel (%p521) target = $region80
        $region79: #{tpu_custom_call.1} parent=11 // pred_region
          _
        $region80: #{tpu_custom_call.1} parent=11 // pred_fallthru
          _
        // Predicated region
        $region81: #{tpu_custom_call.1} parent=11 // pred_check
          %p524 = pneg %p432
        $region82: #{tpu_custom_call.1} parent=11 // pred_check_branch
          %526 = sbr.rel (%p524) target = $region84
        $region83: #{tpu_custom_call.1} parent=11 // pred_region
          _
        $region84: #{tpu_custom_call.1} parent=11 // pred_fallthru
          _
      $region12: #{tpu_custom_call.1} parent=5 // pred_fallthru
        _
      %p527 = scmp.lt.s32.totalorder %s28, 2
      // Predicated region
      $region85: #{tpu_custom_call.1} parent=5 // pred_check
        %p528 = pneg %p527
      $region86: #{tpu_custom_call.1} parent=5 // pred_check_branch
        %530 = sbr.rel (%p528) target = $region88
      $region87: #{tpu_custom_call.1} parent=5 // pred_region
        // Predicated region
        $region89: #{tpu_custom_call.1} parent=87 // pred_check
          %p531 = pneg %p48
        $region90: #{tpu_custom_call.1} parent=87 // pred_check_branch
          %533 = sbr.rel (%p531) target = $region92
        $region91: #{tpu_custom_call.1} parent=87 // pred_region
          %p534 = scmp.lt.s32.totalorder %s28, 1
          %s535 = scalar_select %p534, %s28, 1
          %s536 = smul.addr %s535, 2
          %s537 = smul.addr %s536, 8
          %s538 = scalar_lea.vmem %s0, %s537
        $region92: #{tpu_custom_call.1} parent=87 // pred_fallthru
          _
      $region88: #{tpu_custom_call.1} parent=5 // pred_fallthru
        _
      %p539 = scmp.le.s32.totalorder 1, %s28
      %p540 = scmp.lt.s32.totalorder %s28, 3
      %p541 = pnand %p539, %p540
      %p542 = pneg %p541
      // Predicated region
      $region93: #{tpu_custom_call.1} parent=5 // pred_check
        _
      $region94: #{tpu_custom_call.1} parent=5 // pred_check_branch
        %544 = sbr.rel (%p541) target = $region96
      $region95: #{tpu_custom_call.1} parent=5 // pred_region
        %s545 = ssub.s32 %s28, 1
        %p546 = scmp.lt.s32.totalorder %s33, 1
        %s547 = scalar_select %p546, %s33, 1
        %s548 = smul.addr %s547, 2
        %s549 = smul.addr %s548, 8
        %s550 = scalar_lea.vmem %s0, %s549
        %p551 = pneg %p54
        %p552 = pneg %p51
        %p553 = pneg %p75
        %p554 = pneg %p72
        %p555 = pneg %p96
        %p556 = pneg %p93
        %p557 = pneg %p117
        %p558 = pneg %p114
        %p559 = pneg %p138
        %p560 = pneg %p135
        %p561 = pneg %p159
        %p562 = pneg %p156
        %p563 = pneg %p180
        %p564 = pneg %p177
        %p565 = pneg %p201
        %p566 = pneg %p198
        %p567 = pneg %p222
        %p568 = pneg %p219
        %p569 = pneg %p243
        %p570 = pneg %p240
        %p571 = pneg %p264
        %p572 = pneg %p261
        %p573 = pneg %p285
        %p574 = pneg %p282
        %p575 = pneg %p306
        %p576 = pneg %p303
        %p577 = pneg %p327
        %p578 = pneg %p324
        %p579 = pneg %p348
        %p580 = pneg %p345
        %p581 = pneg %p369
        %p582 = pneg %p366
        %p583 = pneg %p390
        %p584 = pneg %p387
        %p585 = pneg %p411
        %p586 = pneg %p408
        %p587 = pneg %p432
        %p588 = pneg %p429
        %p589 = pneg %p458
        %p590 = pneg %p455
        %s591 = sand.u32 %s445, 1
        %s592 = scalar_lea.sflag [#allocation3], %s591
        %s593 = sand.u32 %s445, 1
        %s594 = smul.addr %s593, 16
        %s595 = scalar_lea.vmem [#allocation2], %s594
        %p596 = scmp.lt.s32.totalorder %s33, 1
        %s597 = scalar_select %p596, %s33, 1
        %s598 = smul.addr %s597, 2
        %s599 = smul.addr %s598, 8
        %s600 = scalar_lea.vmem %s0, %s599
        %v601 = vld [vmem:[%s600] sm:$0xff]
        %v602 = vld [vmem:[%s600 + $0x8] sm:$0xff]
        %v603 = vld [vmem:[%s3] sm:$0xff]
        %v604 = vld [vmem:[%s3 + $0x8] sm:$0xff]
        %v605 = vld [vmem:[%s4] sm:$0xff]
        %v606 = vld [vmem:[%s4 + $0x8] sm:$0xff]
        %608 = vset.pattern.permute.xlu0 0
        %609 = vperm.xlu0 %608, %v605
        %v610 = vpop.permute.xlu0 %609
        %613 = vset.pattern.permute.xlu0 0
        %614 = vperm.xlu0 %613, %v606
        %v615 = vpop.permute.xlu0 %614
        %vm617 = vcmask 130048
        %v619 = vsel %vm617, %v603, 0
        %v622 = vsel %vm617, %v604, 0
        %624 = vmatprep.subr.mxu0 0.0
        %625 = vmatpush1.msra.mxu0 %v601
        %626 = vmatprep.subr.mxu0 0.0
        %627 = vmatpush1.msra.mxu0 %v602
        %628 = vmatprep.subr.mxu0 0.0
        %629 = vmatpush1.msra.mxu0 0.0
        %630 = vmatprep.subr.mxu0 0.0
        %631 = vmatpush1.msra.mxu0 0.0
        %632 = vmatprep.subr.mxu0 0.0
        %633 = vmatpush1.msra.mxu0 0.0
        %634 = vmatprep.subr.mxu0 0.0
        %635 = vmatpush1.msra.mxu0 0.0
        %636 = vmatprep.subr.mxu0 0.0
        %637 = vmatpush1.msra.mxu0 0.0
        %638 = vmatprep.subr.mxu0 0.0
        %639 = vmatpush1.msra.mxu0 0.0
        %640 = vmatprep.subr.mxu0 0.0
        %641 = vmatpush1.msra.mxu0 0.0
        %642 = vmatprep.subr.mxu0 0.0
        %643 = vmatpush1.msra.mxu0 0.0
        %644 = vmatprep.subr.mxu0 0.0
        %645 = vmatpush1.msra.mxu0 0.0
        %646 = vmatprep.subr.mxu0 0.0
        %647 = vmatpush1.msra.mxu0 0.0
        %648 = vmatprep.subr.mxu0 0.0
        %649 = vmatpush1.msra.mxu0 0.0
        %650 = vmatprep.subr.mxu0 0.0
        %651 = vmatpush1.msra.mxu0 0.0
        %652 = vmatprep.subr.mxu0 0.0
        %653 = vmatpush1.msra.mxu0 0.0
        %654 = vmatprep.subr.mxu0 0.0
        %655 = vmatpush1.msra.mxu0 0.0
        %656 = vmatprep.subr.mxu0 0.0
        %657 = vmatpush1.msra.mxu0 0.0
        %658 = vmatprep.subr.mxu0 0.0
        %659 = vmatpush1.msra.mxu0 0.0
        %660 = vmatprep.subr.mxu0 0.0
        %661 = vmatpush1.msra.mxu0 0.0
        %662 = vmatprep.subr.mxu0 0.0
        %663 = vmatpush1.msra.mxu0 0.0
        %664 = vmatprep.subr.mxu0 0.0
        %665 = vmatpush1.msra.mxu0 0.0
        %666 = vmatprep.subr.mxu0 0.0
        %667 = vmatpush1.msra.mxu0 0.0
        %668 = vmatprep.subr.mxu0 0.0
        %669 = vmatpush1.msra.mxu0 0.0
        %670 = vmatprep.subr.mxu0 0.0
        %671 = vmatpush1.msra.mxu0 0.0
        %672 = vmatprep.subr.mxu0 0.0
        %673 = vmatpush1.msra.mxu0 0.0
        %674 = vmatprep.subr.mxu0 0.0
        %675 = vmatpush1.msra.mxu0 0.0
        %676 = vmatprep.subr.mxu0 0.0
        %677 = vmatpush1.msra.mxu0 0.0
        %678 = vmatprep.subr.mxu0 0.0
        %679 = vmatpush1.msra.mxu0 0.0
        %680 = vmatprep.subr.mxu0 0.0
        %681 = vmatpush1.msra.mxu0 0.0
        %682 = vmatprep.subr.mxu0 0.0
        %683 = vmatpush1.msra.mxu0 0.0
        %684 = vmatprep.subr.mxu0 0.0
        %685 = vmatpush1.msra.mxu0 0.0
        %686 = vmatprep.subr.mxu0 0.0
        %687 = vmatpush1.msra.mxu0 0.0
        %688 = vmatprep.mubr.f32.mxu0 0.0
        %689 = vmatmul.mubr.f32.gmra.mrb[0].mxu0 %v619
        %v690 = vpop.f32.mrb[0].mxu0
        %v691 = vadd.f32 %v610, %v690
        %v692 = vpop.f32.mrb[0].mxu0
        %693 = vmatprep.mubr.f32.mxu0 0.0
        %694 = vmatmul.mubr.f32.gmra.mrb[0].mxu0 %v622
        %v695 = vpop.f32.mrb[0].mxu0
        %v696 = vadd.f32 %v615, %v695
        %v697 = vpop.f32.mrb[0].mxu0
        %698 = vdwg.mxu0
        %v699 = vmax.f32 %v691, 0.0
        %v700 = vmax.f32 %v696, 0.0
        %v701 = vld [vmem:[%s6] sm:$0xff]
        %v702 = vld [vmem:[%s6 + $0x8] sm:$0xff]
        %v703 = vld [vmem:[%s1] sm:$0xff]
        %v704 = vld [vmem:[%s1 + $0x8] sm:$0xff]
        %v705 = vld [vmem:[%s1 + $0x10] sm:$0xff]
        %v706 = vld [vmem:[%s1 + $0x18] sm:$0xff]
        %v707 = vld [vmem:[%s1 + $0x20] sm:$0xff]
        %v708 = vld [vmem:[%s1 + $0x28] sm:$0xff]
        %v709 = vld [vmem:[%s1 + $0x30] sm:$0xff]
        %v710 = vld [vmem:[%s1 + $0x38] sm:$0xff]
        %v711 = vld [vmem:[%s1 + $0x40] sm:$0xff]
        %v712 = vld [vmem:[%s1 + $0x48] sm:$0xff]
        %v713 = vld [vmem:[%s1 + $0x50] sm:$0x1]
        %vm714 = vcmask 662528
        %v716 = vsel %vm714, %v699, 0
        %v719 = vsel %vm714, %v700, 0
        %vm721 = vcmask 1040384
        %v723 = vsel %vm721, %v713, 0
        %725 = vmatprep.subr.mxu0 0.0
        %726 = vmatpush1.msra.mxu0 %v703
        %727 = vmatprep.subr.mxu0 0.0
        %728 = vmatpush1.msra.mxu0 %v704
        %729 = vmatprep.subr.mxu0 0.0
        %730 = vmatpush1.msra.mxu0 %v705
        %731 = vmatprep.subr.mxu0 0.0
        %732 = vmatpush1.msra.mxu0 %v706
        %733 = vmatprep.subr.mxu0 0.0
        %734 = vmatpush1.msra.mxu0 %v707
        %735 = vmatprep.subr.mxu0 0.0
        %736 = vmatpush1.msra.mxu0 %v708
        %737 = vmatprep.subr.mxu0 0.0
        %738 = vmatpush1.msra.mxu0 %v709
        %739 = vmatprep.subr.mxu0 0.0
        %740 = vmatpush1.msra.mxu0 %v710
        %741 = vmatprep.subr.mxu0 0.0
        %742 = vmatpush1.msra.mxu0 %v711
        %743 = vmatprep.subr.mxu0 0.0
        %744 = vmatpush1.msra.mxu0 %v712
        %745 = vmatprep.subr.mxu0 0.0
        %746 = vmatpush1.msra.mxu0 %v723
        %747 = vmatprep.subr.mxu0 0.0
        %748 = vmatpush1.msra.mxu0 0.0
        %749 = vmatprep.subr.mxu0 0.0
        %750 = vmatpush1.msra.mxu0 0.0
        %751 = vmatprep.subr.mxu0 0.0
        %752 = vmatpush1.msra.mxu0 0.0
        %753 = vmatprep.subr.mxu0 0.0
        %754 = vmatpush1.msra.mxu0 0.0
        %755 = vmatprep.subr.mxu0 0.0
        %756 = vmatpush1.msra.mxu0 0.0
        %757 = vmatprep.subr.mxu0 0.0
        %758 = vmatpush1.msra.mxu0 0.0
        %759 = vmatprep.subr.mxu0 0.0
        %760 = vmatpush1.msra.mxu0 0.0
        %761 = vmatprep.subr.mxu0 0.0
        %762 = vmatpush1.msra.mxu0 0.0
        %763 = vmatprep.subr.mxu0 0.0
        %764 = vmatpush1.msra.mxu0 0.0
        %765 = vmatprep.subr.mxu0 0.0
        %766 = vmatpush1.msra.mxu0 0.0
        %767 = vmatprep.subr.mxu0 0.0
        %768 = vmatpush1.msra.mxu0 0.0
        %769 = vmatprep.subr.mxu0 0.0
        %770 = vmatpush1.msra.mxu0 0.0
        %771 = vmatprep.subr.mxu0 0.0
        %772 = vmatpush1.msra.mxu0 0.0
        %773 = vmatprep.subr.mxu0 0.0
        %774 = vmatpush1.msra.mxu0 0.0
        %775 = vmatprep.subr.mxu0 0.0
        %776 = vmatpush1.msra.mxu0 0.0
        %777 = vmatprep.subr.mxu0 0.0
        %778 = vmatpush1.msra.mxu0 0.0
        %779 = vmatprep.subr.mxu0 0.0
        %780 = vmatpush1.msra.mxu0 0.0
        %781 = vmatprep.subr.mxu0 0.0
        %782 = vmatpush1.msra.mxu0 0.0
        %783 = vmatprep.subr.mxu0 0.0
        %784 = vmatpush1.msra.mxu0 0.0
        %785 = vmatprep.subr.mxu0 0.0
        %786 = vmatpush1.msra.mxu0 0.0
        %787 = vmatprep.subr.mxu0 0.0
        %788 = vmatpush1.msra.mxu0 0.0
        %789 = vmatprep.mubr.f32.mxu0 0.0
        %790 = vmatmul.mubr.f32.gmra.mrb[0].mxu0 %v716
        %v791 = vpop.f32.mrb[0].mxu0
        %v792 = vadd.f32 0.0, %v791
        %v793 = vpop.f32.mrb[0].mxu0
        %794 = vmatprep.mubr.f32.mxu0 0.0
        %795 = vmatmul.mubr.f32.gmra.mrb[0].mxu0 %v719
        %v796 = vpop.f32.mrb[0].mxu0
        %v797 = vadd.f32 0.0, %v796
        %v798 = vpop.f32.mrb[0].mxu0
        %799 = vdwg.mxu0
        %s800 = scalar_lea.vmem %s1, 88
        %v801 = vld [vmem:[%s800] sm:$0xff]
        %v802 = vld [vmem:[%s800 + $0x8] sm:$0xff]
        %v803 = vld [vmem:[%s800 + $0x10] sm:$0xff]
        %v804 = vld [vmem:[%s800 + $0x18] sm:$0xff]
        %v805 = vld [vmem:[%s800 + $0x20] sm:$0xff]
        %v806 = vld [vmem:[%s800 + $0x28] sm:$0xff]
        %v807 = vld [vmem:[%s800 + $0x30] sm:$0xff]
        %v808 = vld [vmem:[%s800 + $0x38] sm:$0xff]
        %v809 = vld [vmem:[%s800 + $0x40] sm:$0xff]
        %v810 = vld [vmem:[%s800 + $0x48] sm:$0xff]
        %v811 = vld [vmem:[%s800 + $0x50] sm:$0x1]
        %v813 = vsel %vm721, %v811, 0
        %815 = vmatprep.subr.mxu0 0.0
        %816 = vmatpush1.msra.mxu0 %v801
        %817 = vmatprep.subr.mxu0 0.0
        %818 = vmatpush1.msra.mxu0 %v802
        %819 = vmatprep.subr.mxu0 0.0
        %820 = vmatpush1.msra.mxu0 %v803
        %821 = vmatprep.subr.mxu0 0.0
        %822 = vmatpush1.msra.mxu0 %v804
        %823 = vmatprep.subr.mxu0 0.0
        %824 = vmatpush1.msra.mxu0 %v805
        %825 = vmatprep.subr.mxu0 0.0
        %826 = vmatpush1.msra.mxu0 %v806
        %827 = vmatprep.subr.mxu0 0.0
        %828 = vmatpush1.msra.mxu0 %v807
        %829 = vmatprep.subr.mxu0 0.0
        %830 = vmatpush1.msra.mxu0 %v808
        %831 = vmatprep.subr.mxu0 0.0
        %832 = vmatpush1.msra.mxu0 %v809
        %833 = vmatprep.subr.mxu0 0.0
        %834 = vmatpush1.msra.mxu0 %v810
        %835 = vmatprep.subr.mxu0 0.0
        %836 = vmatpush1.msra.mxu0 %v813
        %837 = vmatprep.subr.mxu0 0.0
        %838 = vmatpush1.msra.mxu0 0.0
        %839 = vmatprep.subr.mxu0 0.0
        %840 = vmatpush1.msra.mxu0 0.0
        %841 = vmatprep.subr.mxu0 0.0
        %842 = vmatpush1.msra.mxu0 0.0
        %843 = vmatprep.subr.mxu0 0.0
        %844 = vmatpush1.msra.mxu0 0.0
        %845 = vmatprep.subr.mxu0 0.0
        %846 = vmatpush1.msra.mxu0 0.0
        %847 = vmatprep.subr.mxu0 0.0
        %848 = vmatpush1.msra.mxu0 0.0
        %849 = vmatprep.subr.mxu0 0.0
        %850 = vmatpush1.msra.mxu0 0.0
        %851 = vmatprep.subr.mxu0 0.0
        %852 = vmatpush1.msra.mxu0 0.0
        %853 = vmatprep.subr.mxu0 0.0
        %854 = vmatpush1.msra.mxu0 0.0
        %855 = vmatprep.subr.mxu0 0.0
        %856 = vmatpush1.msra.mxu0 0.0
        %857 = vmatprep.subr.mxu0 0.0
        %858 = vmatpush1.msra.mxu0 0.0
        %859 = vmatprep.subr.mxu0 0.0
        %860 = vmatpush1.msra.mxu0 0.0
        %861 = vmatprep.subr.mxu0 0.0
        %862 = vmatpush1.msra.mxu0 0.0
        %863 = vmatprep.subr.mxu0 0.0
        %864 = vmatpush1.msra.mxu0 0.0
        %865 = vmatprep.subr.mxu0 0.0
        %866 = vmatpush1.msra.mxu0 0.0
        %867 = vmatprep.subr.mxu0 0.0
        %868 = vmatpush1.msra.mxu0 0.0
        %869 = vmatprep.subr.mxu0 0.0
        %870 = vmatpush1.msra.mxu0 0.0
        %871 = vmatprep.subr.mxu0 0.0
        %872 = vmatpush1.msra.mxu0 0.0
        %873 = vmatprep.subr.mxu0 0.0
        %874 = vmatpush1.msra.mxu0 0.0
        %875 = vmatprep.subr.mxu0 0.0
        %876 = vmatpush1.msra.mxu0 0.0
        %877 = vmatprep.subr.mxu0 0.0
        %878 = vmatpush1.msra.mxu0 0.0
        %879 = vmatprep.mubr.f32.mxu0 0.0
        %880 = vmatmul.mubr.f32.gmra.mrb[0].mxu0 %v716
        %v881 = vpop.f32.mrb[0].mxu0
        %v882 = vadd.f32 0.0, %v881
        %v883 = vpop.f32.mrb[0].mxu0
        %884 = vmatprep.mubr.f32.mxu0 0.0
        %885 = vmatmul.mubr.f32.gmra.mrb[0].mxu0 %v719
        %v886 = vpop.f32.mrb[0].mxu0
        %v887 = vadd.f32 0.0, %v886
        %v888 = vpop.f32.mrb[0].mxu0
        %889 = vdwg.mxu0
        %s890 = scalar_lea.vmem %s5, 16
        %v891 = vld [vmem:[%s890] sm:$0xff]
        %v892 = vld [vmem:[%s890 + $0x8] sm:$0xff]
        %894 = vset.pattern.permute.xlu0 0
        %895 = vperm.xlu0 %894, %v891
        %v896 = vpop.permute.xlu0 %895
        %899 = vset.pattern.permute.xlu0 0
        %900 = vperm.xlu0 %899, %v892
        %v901 = vpop.permute.xlu0 %900
        %v903 = vmul.f32 %v792, %v896
        %v904 = vmul.f32 %v797, %v901
        %s905 = scalar_lea.vmem %s5, 64
        %v906 = vld [vmem:[%s905] sm:$0xff]
        %v907 = vld [vmem:[%s905 + $0x8] sm:$0xff]
        %909 = vset.pattern.permute.xlu0 0
        %910 = vperm.xlu0 %909, %v906
        %v911 = vpop.permute.xlu0 %910
        %914 = vset.pattern.permute.xlu0 0
        %915 = vperm.xlu0 %914, %v907
        %v916 = vpop.permute.xlu0 %915
        %v918 = vmul.f32 %v699, %v911
        %v919 = vmul.f32 %v700, %v916
        %v920 = vadd.f32 %v903, %v918
        %v921 = vadd.f32 %v904, %v919
        %s922 = scalar_lea.vmem %s5, 112
        %v923 = vld [vmem:[%s922] sm:$0xff]
        %v924 = vld [vmem:[%s922 + $0x8] sm:$0xff]
        %926 = vset.pattern.permute.xlu0 0
        %927 = vperm.xlu0 %926, %v923
        %v928 = vpop.permute.xlu0 %927
        %931 = vset.pattern.permute.xlu0 0
        %932 = vperm.xlu0 %931, %v924
        %v933 = vpop.permute.xlu0 %932
        %v935 = vmul.f32 %v882, %v928
        %v936 = vmul.f32 %v887, %v933
        %v937 = vadd.f32 %v920, %v935
        %v938 = vadd.f32 %v921, %v936
        %v939 = vld [vmem:[%s5] sm:$0xff]
        %v940 = vld [vmem:[%s5 + $0x8] sm:$0xff]
        %942 = vset.pattern.permute.xlu0 0
        %943 = vperm.xlu0 %942, %v939
        %v944 = vpop.permute.xlu0 %943
        %947 = vset.pattern.permute.xlu0 0
        %948 = vperm.xlu0 %947, %v940
        %v949 = vpop.permute.xlu0 %948
        %v951 = vmul.f32 %v792, %v944
        %v952 = vmul.f32 %v797, %v949
        %s953 = scalar_lea.vmem %s5, 48
        %v954 = vld [vmem:[%s953] sm:$0xff]
        %v955 = vld [vmem:[%s953 + $0x8] sm:$0xff]
        %957 = vset.pattern.permute.xlu0 0
        %958 = vperm.xlu0 %957, %v954
        %v959 = vpop.permute.xlu0 %958
        %962 = vset.pattern.permute.xlu0 0
        %963 = vperm.xlu0 %962, %v955
        %v964 = vpop.permute.xlu0 %963
        %v966 = vmul.f32 %v699, %v959
        %v967 = vmul.f32 %v700, %v964
        %v968 = vadd.f32 %v951, %v966
        %v969 = vadd.f32 %v952, %v967
        %s970 = scalar_lea.vmem %s5, 96
        %v971 = vld [vmem:[%s970] sm:$0xff]
        %v972 = vld [vmem:[%s970 + $0x8] sm:$0xff]
        %974 = vset.pattern.permute.xlu0 0
        %975 = vperm.xlu0 %974, %v971
        %v976 = vpop.permute.xlu0 %975
        %979 = vset.pattern.permute.xlu0 0
        %980 = vperm.xlu0 %979, %v972
        %v981 = vpop.permute.xlu0 %980
        %v983 = vmul.f32 %v882, %v976
        %v984 = vmul.f32 %v887, %v981
        %v985 = vadd.f32 %v968, %v983
        %v986 = vadd.f32 %v969, %v984
        %v987 = vld [vmem:[%s2] sm:$0xff]
        %v988 = vld [vmem:[%s2 + $0x8] sm:$0xff]
        %v989 = vld [vmem:[%s2 + $0x10] sm:$0xff]
        %v990 = vld [vmem:[%s2 + $0x18] sm:$0xff]
        %v991 = vld [vmem:[%s2 + $0x20] sm:$0xff]
        %v992 = vld [vmem:[%s2 + $0x28] sm:$0xff]
        %v993 = vld [vmem:[%s2 + $0x30] sm:$0xff]
        %v994 = vld [vmem:[%s2 + $0x38] sm:$0xff]
        %v995 = vld [vmem:[%s2 + $0x40] sm:$0xff]
        %v996 = vld [vmem:[%s2 + $0x48] sm:$0xff]
        %v997 = vld [vmem:[%s2 + $0x50] sm:$0x1]
        %v999 = vsel %vm714, %v985, 0
        %v1002 = vsel %vm714, %v986, 0
        %v1005 = vsel %vm721, %v997, 0
        %1007 = vmatprep.subr.mxu0 0.0
        %1008 = vmatpush1.msra.mxu0 %v987
        %1009 = vmatprep.subr.mxu0 0.0
        %1010 = vmatpush1.msra.mxu0 %v988
        %1011 = vmatprep.subr.mxu0 0.0
        %1012 = vmatpush1.msra.mxu0 %v989
        %1013 = vmatprep.subr.mxu0 0.0
        %1014 = vmatpush1.msra.mxu0 %v990
        %1015 = vmatprep.subr.mxu0 0.0
        %1016 = vmatpush1.msra.mxu0 %v991
        %1017 = vmatprep.subr.mxu0 0.0
        %1018 = vmatpush1.msra.mxu0 %v992
        %1019 = vmatprep.subr.mxu0 0.0
        %1020 = vmatpush1.msra.mxu0 %v993
        %1021 = vmatprep.subr.mxu0 0.0
        %1022 = vmatpush1.msra.mxu0 %v994
        %1023 = vmatprep.subr.mxu0 0.0
        %1024 = vmatpush1.msra.mxu0 %v995
        %1025 = vmatprep.subr.mxu0 0.0
        %1026 = vmatpush1.msra.mxu0 %v996
        %1027 = vmatprep.subr.mxu0 0.0
        %1028 = vmatpush1.msra.mxu0 %v1005
        %1029 = vmatprep.subr.mxu0 0.0
        %1030 = vmatpush1.msra.mxu0 0.0
        %1031 = vmatprep.subr.mxu0 0.0
        %1032 = vmatpush1.msra.mxu0 0.0
        %1033 = vmatprep.subr.mxu0 0.0
        %1034 = vmatpush1.msra.mxu0 0.0
        %1035 = vmatprep.subr.mxu0 0.0
        %1036 = vmatpush1.msra.mxu0 0.0
        %1037 = vmatprep.subr.mxu0 0.0
        %1038 = vmatpush1.msra.mxu0 0.0
        %1039 = vmatprep.subr.mxu0 0.0
        %1040 = vmatpush1.msra.mxu0 0.0
        %1041 = vmatprep.subr.mxu0 0.0
        %1042 = vmatpush1.msra.mxu0 0.0
        %1043 = vmatprep.subr.mxu0 0.0
        %1044 = vmatpush1.msra.mxu0 0.0
        %1045 = vmatprep.subr.mxu0 0.0
        %1046 = vmatpush1.msra.mxu0 0.0
        %1047 = vmatprep.subr.mxu0 0.0
        %1048 = vmatpush1.msra.mxu0 0.0
        %1049 = vmatprep.subr.mxu0 0.0
        %1050 = vmatpush1.msra.mxu0 0.0
        %1051 = vmatprep.subr.mxu0 0.0
        %1052 = vmatpush1.msra.mxu0 0.0
        %1053 = vmatprep.subr.mxu0 0.0
        %1054 = vmatpush1.msra.mxu0 0.0
        %1055 = vmatprep.subr.mxu0 0.0
        %1056 = vmatpush1.msra.mxu0 0.0
        %1057 = vmatprep.subr.mxu0 0.0
        %1058 = vmatpush1.msra.mxu0 0.0
        %1059 = vmatprep.subr.mxu0 0.0
        %1060 = vmatpush1.msra.mxu0 0.0
        %1061 = vmatprep.subr.mxu0 0.0
        %1062 = vmatpush1.msra.mxu0 0.0
        %1063 = vmatprep.subr.mxu0 0.0
        %1064 = vmatpush1.msra.mxu0 0.0
        %1065 = vmatprep.subr.mxu0 0.0
        %1066 = vmatpush1.msra.mxu0 0.0
        %1067 = vmatprep.subr.mxu0 0.0
        %1068 = vmatpush1.msra.mxu0 0.0
        %1069 = vmatprep.subr.mxu0 0.0
        %1070 = vmatpush1.msra.mxu0 0.0
        %1071 = vmatprep.mubr.f32.mxu0 0.0
        %1072 = vmatmul.mubr.f32.gmra.mrb[0].mxu0 %v999
        %v1073 = vpop.f32.mrb[0].mxu0
        %v1074 = vadd.f32 0.0, %v1073
        %v1075 = vpop.f32.mrb[0].mxu0
        %1076 = vmatprep.mubr.f32.mxu0 0.0
        %1077 = vmatmul.mubr.f32.gmra.mrb[0].mxu0 %v1002
        %v1078 = vpop.f32.mrb[0].mxu0
        %v1079 = vadd.f32 0.0, %v1078
        %v1080 = vpop.f32.mrb[0].mxu0
        %1081 = vdwg.mxu0
        %v1082 = vadd.f32 %v937, %v1074
        %v1083 = vadd.f32 %v938, %v1079
        %s1084 = scalar_lea.vmem %s5, 32
        %v1085 = vld [vmem:[%s1084] sm:$0xff]
        %v1086 = vld [vmem:[%s1084 + $0x8] sm:$0xff]
        %1088 = vset.pattern.permute.xlu0 0
        %1089 = vperm.xlu0 %1088, %v1085
        %v1090 = vpop.permute.xlu0 %1089
        %1093 = vset.pattern.permute.xlu0 0
        %1094 = vperm.xlu0 %1093, %v1086
        %v1095 = vpop.permute.xlu0 %1094
        %v1097 = vmul.f32 %v792, %v1090
        %v1098 = vmul.f32 %v797, %v1095
        %s1099 = scalar_lea.vmem %s5, 80
        %v1100 = vld [vmem:[%s1099] sm:$0xff]
        %v1101 = vld [vmem:[%s1099 + $0x8] sm:$0xff]
        %1103 = vset.pattern.permute.xlu0 0
        %1104 = vperm.xlu0 %1103, %v1100
        %v1105 = vpop.permute.xlu0 %1104
        %1108 = vset.pattern.permute.xlu0 0
        %1109 = vperm.xlu0 %1108, %v1101
        %v1110 = vpop.permute.xlu0 %1109
        %v1112 = vmul.f32 %v699, %v1105
        %v1113 = vmul.f32 %v700, %v1110
        %v1114 = vadd.f32 %v1097, %v1112
        %v1115 = vadd.f32 %v1098, %v1113
        %s1116 = scalar_lea.vmem %s5, 128
        %v1117 = vld [vmem:[%s1116] sm:$0xff]
        %v1118 = vld [vmem:[%s1116 + $0x8] sm:$0xff]
        %1120 = vset.pattern.permute.xlu0 0
        %1121 = vperm.xlu0 %1120, %v1117
        %v1122 = vpop.permute.xlu0 %1121
        %1125 = vset.pattern.permute.xlu0 0
        %1126 = vperm.xlu0 %1125, %v1118
        %v1127 = vpop.permute.xlu0 %1126
        %v1129 = vmul.f32 %v882, %v1122
        %v1130 = vmul.f32 %v887, %v1127
        %v1131 = vadd.f32 %v1114, %v1129
        %v1132 = vadd.f32 %v1115, %v1130
        %s1133 = scalar_lea.vmem %s2, 88
        %v1134 = vld [vmem:[%s1133] sm:$0xff]
        %v1135 = vld [vmem:[%s1133 + $0x8] sm:$0xff]
        %v1136 = vld [vmem:[%s1133 + $0x10] sm:$0xff]
        %v1137 = vld [vmem:[%s1133 + $0x18] sm:$0xff]
        %v1138 = vld [vmem:[%s1133 + $0x20] sm:$0xff]
        %v1139 = vld [vmem:[%s1133 + $0x28] sm:$0xff]
        %v1140 = vld [vmem:[%s1133 + $0x30] sm:$0xff]
        %v1141 = vld [vmem:[%s1133 + $0x38] sm:$0xff]
        %v1142 = vld [vmem:[%s1133 + $0x40] sm:$0xff]
        %v1143 = vld [vmem:[%s1133 + $0x48] sm:$0xff]
        %v1144 = vld [vmem:[%s1133 + $0x50] sm:$0x1]
        %v1146 = vsel %vm714, %v1131, 0
        %v1149 = vsel %vm714, %v1132, 0
        %v1152 = vsel %vm721, %v1144, 0
        %1154 = vmatprep.subr.mxu0 0.0
        %1155 = vmatpush1.msra.mxu0 %v1134
        %1156 = vmatprep.subr.mxu0 0.0
        %1157 = vmatpush1.msra.mxu0 %v1135
        %1158 = vmatprep.subr.mxu0 0.0
        %1159 = vmatpush1.msra.mxu0 %v1136
        %1160 = vmatprep.subr.mxu0 0.0
        %1161 = vmatpush1.msra.mxu0 %v1137
        %1162 = vmatprep.subr.mxu0 0.0
        %1163 = vmatpush1.msra.mxu0 %v1138
        %1164 = vmatprep.subr.mxu0 0.0
        %1165 = vmatpush1.msra.mxu0 %v1139
        %1166 = vmatprep.subr.mxu0 0.0
        %1167 = vmatpush1.msra.mxu0 %v1140
        %1168 = vmatprep.subr.mxu0 0.0
        %1169 = vmatpush1.msra.mxu0 %v1141
        %1170 = vmatprep.subr.mxu0 0.0
        %1171 = vmatpush1.msra.mxu0 %v1142
        %1172 = vmatprep.subr.mxu0 0.0
        %1173 = vmatpush1.msra.mxu0 %v1143
        %1174 = vmatprep.subr.mxu0 0.0
        %1175 = vmatpush1.msra.mxu0 %v1152
        %1176 = vmatprep.subr.mxu0 0.0
        %1177 = vmatpush1.msra.mxu0 0.0
        %1178 = vmatprep.subr.mxu0 0.0
        %1179 = vmatpush1.msra.mxu0 0.0
        %1180 = vmatprep.subr.mxu0 0.0
        %1181 = vmatpush1.msra.mxu0 0.0
        %1182 = vmatprep.subr.mxu0 0.0
        %1183 = vmatpush1.msra.mxu0 0.0
        %1184 = vmatprep.subr.mxu0 0.0
        %1185 = vmatpush1.msra.mxu0 0.0
        %1186 = vmatprep.subr.mxu0 0.0
        %1187 = vmatpush1.msra.mxu0 0.0
        %1188 = vmatprep.subr.mxu0 0.0
        %1189 = vmatpush1.msra.mxu0 0.0
        %1190 = vmatprep.subr.mxu0 0.0
        %1191 = vmatpush1.msra.mxu0 0.0
        %1192 = vmatprep.subr.mxu0 0.0
        %1193 = vmatpush1.msra.mxu0 0.0
        %1194 = vmatprep.subr.mxu0 0.0
        %1195 = vmatpush1.msra.mxu0 0.0
        %1196 = vmatprep.subr.mxu0 0.0
        %1197 = vmatpush1.msra.mxu0 0.0
        %1198 = vmatprep.subr.mxu0 0.0
        %1199 = vmatpush1.msra.mxu0 0.0
        %1200 = vmatprep.subr.mxu0 0.0
        %1201 = vmatpush1.msra.mxu0 0.0
        %1202 = vmatprep.subr.mxu0 0.0
        %1203 = vmatpush1.msra.mxu0 0.0
        %1204 = vmatprep.subr.mxu0 0.0
        %1205 = vmatpush1.msra.mxu0 0.0
        %1206 = vmatprep.subr.mxu0 0.0
        %1207 = vmatpush1.msra.mxu0 0.0
        %1208 = vmatprep.subr.mxu0 0.0
        %1209 = vmatpush1.msra.mxu0 0.0
        %1210 = vmatprep.subr.mxu0 0.0
        %1211 = vmatpush1.msra.mxu0 0.0
        %1212 = vmatprep.subr.mxu0 0.0
        %1213 = vmatpush1.msra.mxu0 0.0
        %1214 = vmatprep.subr.mxu0 0.0
        %1215 = vmatpush1.msra.mxu0 0.0
        %1216 = vmatprep.subr.mxu0 0.0
        %1217 = vmatpush1.msra.mxu0 0.0
        %1218 = vmatprep.mubr.f32.mxu0 0.0
        %1219 = vmatmul.mubr.f32.gmra.mrb[0].mxu0 %v1146
        %v1220 = vpop.f32.mrb[0].mxu0
        %v1221 = vadd.f32 0.0, %v1220
        %v1222 = vpop.f32.mrb[0].mxu0
        %1223 = vmatprep.mubr.f32.mxu0 0.0
        %1224 = vmatmul.mubr.f32.gmra.mrb[0].mxu0 %v1149
        %v1225 = vpop.f32.mrb[0].mxu0
        %v1226 = vadd.f32 0.0, %v1225
        %v1227 = vpop.f32.mrb[0].mxu0
        %1228 = vdwg.mxu0
        %v1229 = vadd.f32 %v1082, %v1221
        %v1230 = vadd.f32 %v1083, %v1226
        %1232 = vset.pattern.permute.xlu0 0
        %1233 = vperm.xlu0 %1232, %v701
        %v1234 = vpop.permute.xlu0 %1233
        %1237 = vset.pattern.permute.xlu0 0
        %1238 = vperm.xlu0 %1237, %v702
        %v1239 = vpop.permute.xlu0 %1238
        %v1241 = vadd.f32 %v1229, %v1234
        %v1242 = vadd.f32 %v1230, %v1239
        %v1243 = vmax.f32 %v1241, 0.0
        %v1244 = vmax.f32 %v1242, 0.0
        %v1245 = vsel %vm714, %v699, 0.0
        %1246 = vadd.xlane.f32.xlu0 %v1245
        %v1247 = vpop.xlane.xlu0 %1246
        %v1248 = vsel %vm714, %v700, 0.0
        %1249 = vadd.xlane.f32.xlu0 %v1248
        %v1250 = vpop.xlane.xlu0 %1249
        %v1251 = vmul.f32 %v1247, 0.012345679
        %v1252 = vmul.f32 %v1250, 0.012345679
        %v1253 = vsel %vm714, %v1243, 0.0
        %1254 = vadd.xlane.f32.xlu0 %v1253
        %v1255 = vpop.xlane.xlu0 %1254
        %v1256 = vsel %vm714, %v1244, 0.0
        %1257 = vadd.xlane.f32.xlu0 %v1256
        %v1258 = vpop.xlane.xlu0 %1257
        %v1259 = vmul.f32 %v1255, 0.012345679
        %v1260 = vmul.f32 %v1258, 0.012345679
        %v1261 = vld [vmem:[%s7] sm:$0xff]
        %v1262 = vld [vmem:[%s8] sm:$0xff]
        %v1264 = vsel %vm617, %v1262, 0
        %1266 = vmatprep.subr.mxu0 0.0
        %1267 = vmatpush1.msra.mxu0 %v1259
        %1268 = vmatprep.subr.mxu0 0.0
        %1269 = vmatpush1.msra.mxu0 %v1260
        %1270 = vmatprep.subr.mxu0 0.0
        %1271 = vmatpush1.msra.mxu0 0.0
        %1272 = vmatprep.subr.mxu0 0.0
        %1273 = vmatpush1.msra.mxu0 0.0
        %1274 = vmatprep.subr.mxu0 0.0
        %1275 = vmatpush1.msra.mxu0 0.0
        %1276 = vmatprep.subr.mxu0 0.0
        %1277 = vmatpush1.msra.mxu0 0.0
        %1278 = vmatprep.subr.mxu0 0.0
        %1279 = vmatpush1.msra.mxu0 0.0
        %1280 = vmatprep.subr.mxu0 0.0
        %1281 = vmatpush1.msra.mxu0 0.0
        %1282 = vmatprep.subr.mxu0 0.0
        %1283 = vmatpush1.msra.mxu0 0.0
        %1284 = vmatprep.subr.mxu0 0.0
        %1285 = vmatpush1.msra.mxu0 0.0
        %1286 = vmatprep.subr.mxu0 0.0
        %1287 = vmatpush1.msra.mxu0 0.0
        %1288 = vmatprep.subr.mxu0 0.0
        %1289 = vmatpush1.msra.mxu0 0.0
        %1290 = vmatprep.subr.mxu0 0.0
        %1291 = vmatpush1.msra.mxu0 0.0
        %1292 = vmatprep.subr.mxu0 0.0
        %1293 = vmatpush1.msra.mxu0 0.0
        %1294 = vmatprep.subr.mxu0 0.0
        %1295 = vmatpush1.msra.mxu0 0.0
        %1296 = vmatprep.subr.mxu0 0.0
        %1297 = vmatpush1.msra.mxu0 0.0
        %1298 = vmatprep.subr.mxu0 0.0
        %1299 = vmatpush1.msra.mxu0 0.0
        %1300 = vmatprep.subr.mxu0 0.0
        %1301 = vmatpush1.msra.mxu0 0.0
        %1302 = vmatprep.subr.mxu0 0.0
        %1303 = vmatpush1.msra.mxu0 0.0
        %1304 = vmatprep.subr.mxu0 0.0
        %1305 = vmatpush1.msra.mxu0 0.0
        %1306 = vmatprep.subr.mxu0 0.0
        %1307 = vmatpush1.msra.mxu0 0.0
        %1308 = vmatprep.subr.mxu0 0.0
        %1309 = vmatpush1.msra.mxu0 0.0
        %1310 = vmatprep.subr.mxu0 0.0
        %1311 = vmatpush1.msra.mxu0 0.0
        %1312 = vmatprep.subr.mxu0 0.0
        %1313 = vmatpush1.msra.mxu0 0.0
        %1314 = vmatprep.subr.mxu0 0.0
        %1315 = vmatpush1.msra.mxu0 0.0
        %1316 = vmatprep.subr.mxu0 0.0
        %1317 = vmatpush1.msra.mxu0 0.0
        %1318 = vmatprep.subr.mxu0 0.0
        %1319 = vmatpush1.msra.mxu0 0.0
        %1320 = vmatprep.subr.mxu0 0.0
        %1321 = vmatpush1.msra.mxu0 0.0
        %1322 = vmatprep.subr.mxu0 0.0
        %1323 = vmatpush1.msra.mxu0 0.0
        %1324 = vmatprep.subr.mxu0 0.0
        %1325 = vmatpush1.msra.mxu0 0.0
        %1326 = vmatprep.subr.mxu0 0.0
        %1327 = vmatpush1.msra.mxu0 0.0
        %1328 = vmatprep.subr.mxu0 0.0
        %1329 = vmatpush1.msra.mxu0 0.0
        %1330 = vmatprep.mubr.f32.mxu0 0.0
        %1331 = vmatmul.mubr.f32.gmra.mrb[0].mxu0 %v1264
        %v1332 = vpop.f32.mrb[0].mxu0
        %v1333 = vadd.f32 0.0, %v1332
        %v1334 = vpop.f32.mrb[0].mxu0
        %1335 = vdwg.mxu0
        %v1337 = vsel %vm617, %v1261, 0
        %1339 = vmatprep.subr.mxu0 0.0
        %1340 = vmatpush1.msra.mxu0 %v1251
        %1341 = vmatprep.subr.mxu0 0.0
        %1342 = vmatpush1.msra.mxu0 %v1252
        %1343 = vmatprep.subr.mxu0 0.0
        %1344 = vmatpush1.msra.mxu0 0.0
        %1345 = vmatprep.subr.mxu0 0.0
        %1346 = vmatpush1.msra.mxu0 0.0
        %1347 = vmatprep.subr.mxu0 0.0
        %1348 = vmatpush1.msra.mxu0 0.0
        %1349 = vmatprep.subr.mxu0 0.0
        %1350 = vmatpush1.msra.mxu0 0.0
        %1351 = vmatprep.subr.mxu0 0.0
        %1352 = vmatpush1.msra.mxu0 0.0
        %1353 = vmatprep.subr.mxu0 0.0
        %1354 = vmatpush1.msra.mxu0 0.0
        %1355 = vmatprep.subr.mxu0 0.0
        %1356 = vmatpush1.msra.mxu0 0.0
        %1357 = vmatprep.subr.mxu0 0.0
        %1358 = vmatpush1.msra.mxu0 0.0
        %1359 = vmatprep.subr.mxu0 0.0
        %1360 = vmatpush1.msra.mxu0 0.0
        %1361 = vmatprep.subr.mxu0 0.0
        %1362 = vmatpush1.msra.mxu0 0.0
        %1363 = vmatprep.subr.mxu0 0.0
        %1364 = vmatpush1.msra.mxu0 0.0
        %1365 = vmatprep.subr.mxu0 0.0
        %1366 = vmatpush1.msra.mxu0 0.0
        %1367 = vmatprep.subr.mxu0 0.0
        %1368 = vmatpush1.msra.mxu0 0.0
        %1369 = vmatprep.subr.mxu0 0.0
        %1370 = vmatpush1.msra.mxu0 0.0
        %1371 = vmatprep.subr.mxu0 0.0
        %1372 = vmatpush1.msra.mxu0 0.0
        %1373 = vmatprep.subr.mxu0 0.0
        %1374 = vmatpush1.msra.mxu0 0.0
        %1375 = vmatprep.subr.mxu0 0.0
        %1376 = vmatpush1.msra.mxu0 0.0
        %1377 = vmatprep.subr.mxu0 0.0
        %1378 = vmatpush1.msra.mxu0 0.0
        %1379 = vmatprep.subr.mxu0 0.0
        %1380 = vmatpush1.msra.mxu0 0.0
        %1381 = vmatprep.subr.mxu0 0.0
        %1382 = vmatpush1.msra.mxu0 0.0
        %1383 = vmatprep.subr.mxu0 0.0
        %1384 = vmatpush1.msra.mxu0 0.0
        %1385 = vmatprep.subr.mxu0 0.0
        %1386 = vmatpush1.msra.mxu0 0.0
        %1387 = vmatprep.subr.mxu0 0.0
        %1388 = vmatpush1.msra.mxu0 0.0
        %1389 = vmatprep.subr.mxu0 0.0
        %1390 = vmatpush1.msra.mxu0 0.0
        %1391 = vmatprep.subr.mxu0 0.0
        %1392 = vmatpush1.msra.mxu0 0.0
        %1393 = vmatprep.subr.mxu0 0.0
        %1394 = vmatpush1.msra.mxu0 0.0
        %1395 = vmatprep.subr.mxu0 0.0
        %1396 = vmatpush1.msra.mxu0 0.0
        %1397 = vmatprep.subr.mxu0 0.0
        %1398 = vmatpush1.msra.mxu0 0.0
        %1399 = vmatprep.subr.mxu0 0.0
        %1400 = vmatpush1.msra.mxu0 0.0
        %1401 = vmatprep.subr.mxu0 0.0
        %1402 = vmatpush1.msra.mxu0 0.0
        %1403 = vmatprep.mubr.f32.mxu0 0.0
        %1404 = vmatmul.mubr.f32.gmra.mrb[0].mxu0 %v1337
        %v1405 = vpop.f32.mrb[0].mxu0
        %v1406 = vadd.f32 %v1333, %v1405
        %v1407 = vpop.f32.mrb[0].mxu0
        %1408 = vdwg.mxu0
        %v1409 = vld [vmem:[%s9] sm:$0xff]
        %v1410 = vadd.f32 %v1406, %v1409
        %v1411 = vmax.f32 %v1410, 0.0
        %v1412 = vld [vmem:[%s10] sm:$0xff]
        %v1413 = vld [vmem:[%s10 + $0x8] sm:$0xff]
        %v1414 = vld [vmem:[%s11] sm:$0xff]
        %v1415 = vld [vmem:[%s11 + $0x8] sm:$0xff]
        %vm1416 = vcmask 64512
        %v1418 = vsel %vm1416, %v1412, 0
        %v1421 = vsel %vm1416, %v1413, 0
        %1423 = vmatprep.subr.mxu0 0.0
        %1424 = vmatpush1.msra.mxu0 %v1411
        %1425 = vmatprep.subr.mxu0 0.0
        %1426 = vmatpush1.msra.mxu0 0.0
        %1427 = vmatprep.subr.mxu0 0.0
        %1428 = vmatpush1.msra.mxu0 0.0
        %1429 = vmatprep.subr.mxu0 0.0
        %1430 = vmatpush1.msra.mxu0 0.0
        %1431 = vmatprep.subr.mxu0 0.0
        %1432 = vmatpush1.msra.mxu0 0.0
        %1433 = vmatprep.subr.mxu0 0.0
        %1434 = vmatpush1.msra.mxu0 0.0
        %1435 = vmatprep.subr.mxu0 0.0
        %1436 = vmatpush1.msra.mxu0 0.0
        %1437 = vmatprep.subr.mxu0 0.0
        %1438 = vmatpush1.msra.mxu0 0.0
        %1439 = vmatprep.subr.mxu0 0.0
        %1440 = vmatpush1.msra.mxu0 0.0
        %1441 = vmatprep.subr.mxu0 0.0
        %1442 = vmatpush1.msra.mxu0 0.0
        %1443 = vmatprep.subr.mxu0 0.0
        %1444 = vmatpush1.msra.mxu0 0.0
        %1445 = vmatprep.subr.mxu0 0.0
        %1446 = vmatpush1.msra.mxu0 0.0
        %1447 = vmatprep.subr.mxu0 0.0
        %1448 = vmatpush1.msra.mxu0 0.0
        %1449 = vmatprep.subr.mxu0 0.0
        %1450 = vmatpush1.msra.mxu0 0.0
        %1451 = vmatprep.subr.mxu0 0.0
        %1452 = vmatpush1.msra.mxu0 0.0
        %1453 = vmatprep.subr.mxu0 0.0
        %1454 = vmatpush1.msra.mxu0 0.0
        %1455 = vmatprep.subr.mxu0 0.0
        %1456 = vmatpush1.msra.mxu0 0.0
        %1457 = vmatprep.subr.mxu0 0.0
        %1458 = vmatpush1.msra.mxu0 0.0
        %1459 = vmatprep.subr.mxu0 0.0
        %1460 = vmatpush1.msra.mxu0 0.0
        %1461 = vmatprep.subr.mxu0 0.0
        %1462 = vmatpush1.msra.mxu0 0.0
        %1463 = vmatprep.subr.mxu0 0.0
        %1464 = vmatpush1.msra.mxu0 0.0
        %1465 = vmatprep.subr.mxu0 0.0
        %1466 = vmatpush1.msra.mxu0 0.0
        %1467 = vmatprep.subr.mxu0 0.0
        %1468 = vmatpush1.msra.mxu0 0.0
        %1469 = vmatprep.subr.mxu0 0.0
        %1470 = vmatpush1.msra.mxu0 0.0
        %1471 = vmatprep.subr.mxu0 0.0
        %1472 = vmatpush1.msra.mxu0 0.0
        %1473 = vmatprep.subr.mxu0 0.0
        %1474 = vmatpush1.msra.mxu0 0.0
        %1475 = vmatprep.subr.mxu0 0.0
        %1476 = vmatpush1.msra.mxu0 0.0
        %1477 = vmatprep.subr.mxu0 0.0
        %1478 = vmatpush1.msra.mxu0 0.0
        %1479 = vmatprep.subr.mxu0 0.0
        %1480 = vmatpush1.msra.mxu0 0.0
        %1481 = vmatprep.subr.mxu0 0.0
        %1482 = vmatpush1.msra.mxu0 0.0
        %1483 = vmatprep.subr.mxu0 0.0
        %1484 = vmatpush1.msra.mxu0 0.0
        %1485 = vmatprep.subr.mxu0 0.0
        %1486 = vmatpush1.msra.mxu0 0.0
        %1487 = vmatprep.mubr.f32.mxu0 0.0
        %1488 = vmatmul.mubr.f32.gmra.mrb[0].mxu0 %v1418
        %v1489 = vpop.f32.mrb[0].mxu0
        %v1490 = vadd.f32 %v1414, %v1489
        %v1491 = vpop.f32.mrb[0].mxu0
        %1492 = vmatprep.mubr.f32.mxu0 0.0
        %1493 = vmatmul.mubr.f32.gmra.mrb[0].mxu0 %v1421
        %v1494 = vpop.f32.mrb[0].mxu0
        %v1495 = vadd.f32 %v1415, %v1494
        %v1496 = vpop.f32.mrb[0].mxu0
        %1497 = vdwg.mxu0
        %v1498 = vmax.f32 %v1490, 0.0
        %v1499 = vmax.f32 %v1495, 0.0
        %v1500 = vmin.f32 %v1498, 1.0
        %v1501 = vmin.f32 %v1499, 1.0
        %v1502 = vld [vmem:[%s12] sm:$0xff]
        %v1503 = vld [vmem:[%s12 + $0x8] sm:$0xff]
        %v1504 = vld [vmem:[%s13] sm:$0xff]
        %v1505 = vld [vmem:[%s13 + $0x8] sm:$0xff]
        %v1507 = vsel %vm1416, %v1502, 0
        %v1510 = vsel %vm1416, %v1503, 0
        %1512 = vmatprep.subr.mxu0 0.0
        %1513 = vmatpush1.msra.mxu0 %v1411
        %1514 = vmatprep.subr.mxu0 0.0
        %1515 = vmatpush1.msra.mxu0 0.0
        %1516 = vmatprep.subr.mxu0 0.0
        %1517 = vmatpush1.msra.mxu0 0.0
        %1518 = vmatprep.subr.mxu0 0.0
        %1519 = vmatpush1.msra.mxu0 0.0
        %1520 = vmatprep.subr.mxu0 0.0
        %1521 = vmatpush1.msra.mxu0 0.0
        %1522 = vmatprep.subr.mxu0 0.0
        %1523 = vmatpush1.msra.mxu0 0.0
        %1524 = vmatprep.subr.mxu0 0.0
        %1525 = vmatpush1.msra.mxu0 0.0
        %1526 = vmatprep.subr.mxu0 0.0
        %1527 = vmatpush1.msra.mxu0 0.0
        %1528 = vmatprep.subr.mxu0 0.0
        %1529 = vmatpush1.msra.mxu0 0.0
        %1530 = vmatprep.subr.mxu0 0.0
        %1531 = vmatpush1.msra.mxu0 0.0
        %1532 = vmatprep.subr.mxu0 0.0
        %1533 = vmatpush1.msra.mxu0 0.0
        %1534 = vmatprep.subr.mxu0 0.0
        %1535 = vmatpush1.msra.mxu0 0.0
        %1536 = vmatprep.subr.mxu0 0.0
        %1537 = vmatpush1.msra.mxu0 0.0
        %1538 = vmatprep.subr.mxu0 0.0
        %1539 = vmatpush1.msra.mxu0 0.0
        %1540 = vmatprep.subr.mxu0 0.0
        %1541 = vmatpush1.msra.mxu0 0.0
        %1542 = vmatprep.subr.mxu0 0.0
        %1543 = vmatpush1.msra.mxu0 0.0
        %1544 = vmatprep.subr.mxu0 0.0
        %1545 = vmatpush1.msra.mxu0 0.0
        %1546 = vmatprep.subr.mxu0 0.0
        %1547 = vmatpush1.msra.mxu0 0.0
        %1548 = vmatprep.subr.mxu0 0.0
        %1549 = vmatpush1.msra.mxu0 0.0
        %1550 = vmatprep.subr.mxu0 0.0
        %1551 = vmatpush1.msra.mxu0 0.0
        %1552 = vmatprep.subr.mxu0 0.0
        %1553 = vmatpush1.msra.mxu0 0.0
        %1554 = vmatprep.subr.mxu0 0.0
        %1555 = vmatpush1.msra.mxu0 0.0
        %1556 = vmatprep.subr.mxu0 0.0
        %1557 = vmatpush1.msra.mxu0 0.0
        %1558 = vmatprep.subr.mxu0 0.0
        %1559 = vmatpush1.msra.mxu0 0.0
        %1560 = vmatprep.subr.mxu0 0.0
        %1561 = vmatpush1.msra.mxu0 0.0
        %1562 = vmatprep.subr.mxu0 0.0
        %1563 = vmatpush1.msra.mxu0 0.0
        %1564 = vmatprep.subr.mxu0 0.0
        %1565 = vmatpush1.msra.mxu0 0.0
        %1566 = vmatprep.subr.mxu0 0.0
        %1567 = vmatpush1.msra.mxu0 0.0
        %1568 = vmatprep.subr.mxu0 0.0
        %1569 = vmatpush1.msra.mxu0 0.0
        %1570 = vmatprep.subr.mxu0 0.0
        %1571 = vmatpush1.msra.mxu0 0.0
        %1572 = vmatprep.subr.mxu0 0.0
        %1573 = vmatpush1.msra.mxu0 0.0
        %1574 = vmatprep.subr.mxu0 0.0
        %1575 = vmatpush1.msra.mxu0 0.0
        %1576 = vmatprep.mubr.f32.mxu0 0.0
        %1577 = vmatmul.mubr.f32.gmra.mrb[0].mxu0 %v1507
        %v1578 = vpop.f32.mrb[0].mxu0
        %v1579 = vadd.f32 %v1504, %v1578
        %v1580 = vpop.f32.mrb[0].mxu0
        %1581 = vmatprep.mubr.f32.mxu0 0.0
        %1582 = vmatmul.mubr.f32.gmra.mrb[0].mxu0 %v1510
        %v1583 = vpop.f32.mrb[0].mxu0
        %v1584 = vadd.f32 %v1505, %v1583
        %v1585 = vpop.f32.mrb[0].mxu0
        %1586 = vdwg.mxu0
        %v1587 = vmax.f32 %v1579, 0.0
        %v1588 = vmax.f32 %v1584, 0.0
        %v1589 = vmin.f32 %v1587, 1.0
        %v1590 = vmin.f32 %v1588, 1.0
        %1592 = vset.pattern.permute.xlu0 0
        %1593 = vperm.xlu0 %1592, %v1500
        %v1594 = vpop.permute.xlu0 %1593
        %1597 = vset.pattern.permute.xlu0 0
        %1598 = vperm.xlu0 %1597, %v1501
        %v1599 = vpop.permute.xlu0 %1598
        %v1601 = vmul.f32 %v699, %v1594
        %v1602 = vmul.f32 %v700, %v1599
        %1604 = vset.pattern.permute.xlu0 0
        %1605 = vperm.xlu0 %1604, %v1589
        %v1606 = vpop.permute.xlu0 %1605
        %1609 = vset.pattern.permute.xlu0 0
        %1610 = vperm.xlu0 %1609, %v1590
        %v1611 = vpop.permute.xlu0 %1610
        %v1613 = vmul.f32 %v1243, %v1606
        %v1614 = vmul.f32 %v1244, %v1611
        %v1615 = vld [vmem:[%s14] sm:$0xff]
        %v1616 = vld [vmem:[%s15] sm:$0xff]
        %v1618 = vsel %vm617, %v1616, 0
        %1620 = vmatprep.subr.mxu0 0.0
        %1621 = vmatpush1.msra.mxu0 %v1613
        %1622 = vmatprep.subr.mxu0 0.0
        %1623 = vmatpush1.msra.mxu0 %v1614
        %1624 = vmatprep.subr.mxu0 0.0
        %1625 = vmatpush1.msra.mxu0 0.0
        %1626 = vmatprep.subr.mxu0 0.0
        %1627 = vmatpush1.msra.mxu0 0.0
        %1628 = vmatprep.subr.mxu0 0.0
        %1629 = vmatpush1.msra.mxu0 0.0
        %1630 = vmatprep.subr.mxu0 0.0
        %1631 = vmatpush1.msra.mxu0 0.0
        %1632 = vmatprep.subr.mxu0 0.0
        %1633 = vmatpush1.msra.mxu0 0.0
        %1634 = vmatprep.subr.mxu0 0.0
        %1635 = vmatpush1.msra.mxu0 0.0
        %1636 = vmatprep.subr.mxu0 0.0
        %1637 = vmatpush1.msra.mxu0 0.0
        %1638 = vmatprep.subr.mxu0 0.0
        %1639 = vmatpush1.msra.mxu0 0.0
        %1640 = vmatprep.subr.mxu0 0.0
        %1641 = vmatpush1.msra.mxu0 0.0
        %1642 = vmatprep.subr.mxu0 0.0
        %1643 = vmatpush1.msra.mxu0 0.0
        %1644 = vmatprep.subr.mxu0 0.0
        %1645 = vmatpush1.msra.mxu0 0.0
        %1646 = vmatprep.subr.mxu0 0.0
        %1647 = vmatpush1.msra.mxu0 0.0
        %1648 = vmatprep.subr.mxu0 0.0
        %1649 = vmatpush1.msra.mxu0 0.0
        %1650 = vmatprep.subr.mxu0 0.0
        %1651 = vmatpush1.msra.mxu0 0.0
        %1652 = vmatprep.subr.mxu0 0.0
        %1653 = vmatpush1.msra.mxu0 0.0
        %1654 = vmatprep.subr.mxu0 0.0
        %1655 = vmatpush1.msra.mxu0 0.0
        %1656 = vmatprep.subr.mxu0 0.0
        %1657 = vmatpush1.msra.mxu0 0.0
        %1658 = vmatprep.subr.mxu0 0.0
        %1659 = vmatpush1.msra.mxu0 0.0
        %1660 = vmatprep.subr.mxu0 0.0
        %1661 = vmatpush1.msra.mxu0 0.0
        %1662 = vmatprep.subr.mxu0 0.0
        %1663 = vmatpush1.msra.mxu0 0.0
        %1664 = vmatprep.subr.mxu0 0.0
        %1665 = vmatpush1.msra.mxu0 0.0
        %1666 = vmatprep.subr.mxu0 0.0
        %1667 = vmatpush1.msra.mxu0 0.0
        %1668 = vmatprep.subr.mxu0 0.0
        %1669 = vmatpush1.msra.mxu0 0.0
        %1670 = vmatprep.subr.mxu0 0.0
        %1671 = vmatpush1.msra.mxu0 0.0
        %1672 = vmatprep.subr.mxu0 0.0
        %1673 = vmatpush1.msra.mxu0 0.0
        %1674 = vmatprep.subr.mxu0 0.0
        %1675 = vmatpush1.msra.mxu0 0.0
        %1676 = vmatprep.subr.mxu0 0.0
        %1677 = vmatpush1.msra.mxu0 0.0
        %1678 = vmatprep.subr.mxu0 0.0
        %1679 = vmatpush1.msra.mxu0 0.0
        %1680 = vmatprep.subr.mxu0 0.0
        %1681 = vmatpush1.msra.mxu0 0.0
        %1682 = vmatprep.subr.mxu0 0.0
        %1683 = vmatpush1.msra.mxu0 0.0
        %1684 = vmatprep.mubr.f32.mxu0 0.0
        %1685 = vmatmul.mubr.f32.gmra.mrb[0].mxu0 %v1618
        %v1686 = vpop.f32.mrb[0].mxu0
        %v1687 = vadd.f32 0.0, %v1686
        %v1688 = vpop.f32.mrb[0].mxu0
        %1689 = vdwg.mxu0
        %v1691 = vsel %vm617, %v1615, 0
        %1693 = vmatprep.subr.mxu0 0.0
        %1694 = vmatpush1.msra.mxu0 %v1601
        %1695 = vmatprep.subr.mxu0 0.0
        %1696 = vmatpush1.msra.mxu0 %v1602
        %1697 = vmatprep.subr.mxu0 0.0
        %1698 = vmatpush1.msra.mxu0 0.0
        %1699 = vmatprep.subr.mxu0 0.0
        %1700 = vmatpush1.msra.mxu0 0.0
        %1701 = vmatprep.subr.mxu0 0.0
        %1702 = vmatpush1.msra.mxu0 0.0
        %1703 = vmatprep.subr.mxu0 0.0
        %1704 = vmatpush1.msra.mxu0 0.0
        %1705 = vmatprep.subr.mxu0 0.0
        %1706 = vmatpush1.msra.mxu0 0.0
        %1707 = vmatprep.subr.mxu0 0.0
        %1708 = vmatpush1.msra.mxu0 0.0
        %1709 = vmatprep.subr.mxu0 0.0
        %1710 = vmatpush1.msra.mxu0 0.0
        %1711 = vmatprep.subr.mxu0 0.0
        %1712 = vmatpush1.msra.mxu0 0.0
        %1713 = vmatprep.subr.mxu0 0.0
        %1714 = vmatpush1.msra.mxu0 0.0
        %1715 = vmatprep.subr.mxu0 0.0
        %1716 = vmatpush1.msra.mxu0 0.0
        %1717 = vmatprep.subr.mxu0 0.0
        %1718 = vmatpush1.msra.mxu0 0.0
        %1719 = vmatprep.subr.mxu0 0.0
        %1720 = vmatpush1.msra.mxu0 0.0
        %1721 = vmatprep.subr.mxu0 0.0
        %1722 = vmatpush1.msra.mxu0 0.0
        %1723 = vmatprep.subr.mxu0 0.0
        %1724 = vmatpush1.msra.mxu0 0.0
        %1725 = vmatprep.subr.mxu0 0.0
        %1726 = vmatpush1.msra.mxu0 0.0
        %1727 = vmatprep.subr.mxu0 0.0
        %1728 = vmatpush1.msra.mxu0 0.0
        %1729 = vmatprep.subr.mxu0 0.0
        %1730 = vmatpush1.msra.mxu0 0.0
        %1731 = vmatprep.subr.mxu0 0.0
        %1732 = vmatpush1.msra.mxu0 0.0
        %1733 = vmatprep.subr.mxu0 0.0
        %1734 = vmatpush1.msra.mxu0 0.0
        %1735 = vmatprep.subr.mxu0 0.0
        %1736 = vmatpush1.msra.mxu0 0.0
        %1737 = vmatprep.subr.mxu0 0.0
        %1738 = vmatpush1.msra.mxu0 0.0
        %1739 = vmatprep.subr.mxu0 0.0
        %1740 = vmatpush1.msra.mxu0 0.0
        %1741 = vmatprep.subr.mxu0 0.0
        %1742 = vmatpush1.msra.mxu0 0.0
        %1743 = vmatprep.subr.mxu0 0.0
        %1744 = vmatpush1.msra.mxu0 0.0
        %1745 = vmatprep.subr.mxu0 0.0
        %1746 = vmatpush1.msra.mxu0 0.0
        %1747 = vmatprep.subr.mxu0 0.0
        %1748 = vmatpush1.msra.mxu0 0.0
        %1749 = vmatprep.subr.mxu0 0.0
        %1750 = vmatpush1.msra.mxu0 0.0
        %1751 = vmatprep.subr.mxu0 0.0
        %1752 = vmatpush1.msra.mxu0 0.0
        %1753 = vmatprep.subr.mxu0 0.0
        %1754 = vmatpush1.msra.mxu0 0.0
        %1755 = vmatprep.subr.mxu0 0.0
        %1756 = vmatpush1.msra.mxu0 0.0
        %1757 = vmatprep.mubr.f32.mxu0 0.0
        %1758 = vmatmul.mubr.f32.gmra.mrb[0].mxu0 %v1691
        %v1759 = vpop.f32.mrb[0].mxu0
        %v1760 = vadd.f32 %v1687, %v1759
        %v1761 = vpop.f32.mrb[0].mxu0
        %1762 = vdwg.mxu0
        %v1763 = vld [vmem:[%s16] sm:$0xff]
        %1765 = vset.pattern.permute.xlu0 0
        %1766 = vperm.xlu0 %1765, %v1763
        %v1767 = vpop.permute.xlu0 %1766
        %v1769 = vadd.f32 %v1760, %v1767
        %v1770 = vld [vmem:[%s18] sm:$0xff]
        %v1772 = vsel %vm714, %v1769, 0
        %1774 = vmatprep.subr.mxu0 0.0
        %1775 = vmatpush1.msra.mxu0 %v703
        %1776 = vmatprep.subr.mxu0 0.0
        %1777 = vmatpush1.msra.mxu0 %v704
        %1778 = vmatprep.subr.mxu0 0.0
        %1779 = vmatpush1.msra.mxu0 %v705
        %1780 = vmatprep.subr.mxu0 0.0
        %1781 = vmatpush1.msra.mxu0 %v706
        %1782 = vmatprep.subr.mxu0 0.0
        %1783 = vmatpush1.msra.mxu0 %v707
        %1784 = vmatprep.subr.mxu0 0.0
        %1785 = vmatpush1.msra.mxu0 %v708
        %1786 = vmatprep.subr.mxu0 0.0
        %1787 = vmatpush1.msra.mxu0 %v709
        %1788 = vmatprep.subr.mxu0 0.0
        %1789 = vmatpush1.msra.mxu0 %v710
        %1790 = vmatprep.subr.mxu0 0.0
        %1791 = vmatpush1.msra.mxu0 %v711
        %1792 = vmatprep.subr.mxu0 0.0
        %1793 = vmatpush1.msra.mxu0 %v712
        %1794 = vmatprep.subr.mxu0 0.0
        %1795 = vmatpush1.msra.mxu0 %v723
        %1796 = vmatprep.subr.mxu0 0.0
        %1797 = vmatpush1.msra.mxu0 0.0
        %1798 = vmatprep.subr.mxu0 0.0
        %1799 = vmatpush1.msra.mxu0 0.0
        %1800 = vmatprep.subr.mxu0 0.0
        %1801 = vmatpush1.msra.mxu0 0.0
        %1802 = vmatprep.subr.mxu0 0.0
        %1803 = vmatpush1.msra.mxu0 0.0
        %1804 = vmatprep.subr.mxu0 0.0
        %1805 = vmatpush1.msra.mxu0 0.0
        %1806 = vmatprep.subr.mxu0 0.0
        %1807 = vmatpush1.msra.mxu0 0.0
        %1808 = vmatprep.subr.mxu0 0.0
        %1809 = vmatpush1.msra.mxu0 0.0
        %1810 = vmatprep.subr.mxu0 0.0
        %1811 = vmatpush1.msra.mxu0 0.0
        %1812 = vmatprep.subr.mxu0 0.0
        %1813 = vmatpush1.msra.mxu0 0.0
        %1814 = vmatprep.subr.mxu0 0.0
        %1815 = vmatpush1.msra.mxu0 0.0
        %1816 = vmatprep.subr.mxu0 0.0
        %1817 = vmatpush1.msra.mxu0 0.0
        %1818 = vmatprep.subr.mxu0 0.0
        %1819 = vmatpush1.msra.mxu0 0.0
        %1820 = vmatprep.subr.mxu0 0.0
        %1821 = vmatpush1.msra.mxu0 0.0
        %1822 = vmatprep.subr.mxu0 0.0
        %1823 = vmatpush1.msra.mxu0 0.0
        %1824 = vmatprep.subr.mxu0 0.0
        %1825 = vmatpush1.msra.mxu0 0.0
        %1826 = vmatprep.subr.mxu0 0.0
        %1827 = vmatpush1.msra.mxu0 0.0
        %1828 = vmatprep.subr.mxu0 0.0
        %1829 = vmatpush1.msra.mxu0 0.0
        %1830 = vmatprep.subr.mxu0 0.0
        %1831 = vmatpush1.msra.mxu0 0.0
        %1832 = vmatprep.subr.mxu0 0.0
        %1833 = vmatpush1.msra.mxu0 0.0
        %1834 = vmatprep.subr.mxu0 0.0
        %1835 = vmatpush1.msra.mxu0 0.0
        %1836 = vmatprep.subr.mxu0 0.0
        %1837 = vmatpush1.msra.mxu0 0.0
        %1838 = vmatprep.mubr.f32.mxu0 0.0
        %1839 = vmatmul.mubr.f32.gmra.mrb[0].mxu0 %v1772
        %v1840 = vpop.f32.mrb[0].mxu0
        %v1841 = vadd.f32 0.0, %v1840
        %v1842 = vpop.f32.mrb[0].mxu0
        %1843 = vdwg.mxu0
        %1844 = vmatprep.subr.mxu0 0.0
        %1845 = vmatpush1.msra.mxu0 %v801
        %1846 = vmatprep.subr.mxu0 0.0
        %1847 = vmatpush1.msra.mxu0 %v802
        %1848 = vmatprep.subr.mxu0 0.0
        %1849 = vmatpush1.msra.mxu0 %v803
        %1850 = vmatprep.subr.mxu0 0.0
        %1851 = vmatpush1.msra.mxu0 %v804
        %1852 = vmatprep.subr.mxu0 0.0
        %1853 = vmatpush1.msra.mxu0 %v805
        %1854 = vmatprep.subr.mxu0 0.0
        %1855 = vmatpush1.msra.mxu0 %v806
        %1856 = vmatprep.subr.mxu0 0.0
        %1857 = vmatpush1.msra.mxu0 %v807
        %1858 = vmatprep.subr.mxu0 0.0
        %1859 = vmatpush1.msra.mxu0 %v808
        %1860 = vmatprep.subr.mxu0 0.0
        %1861 = vmatpush1.msra.mxu0 %v809
        %1862 = vmatprep.subr.mxu0 0.0
        %1863 = vmatpush1.msra.mxu0 %v810
        %1864 = vmatprep.subr.mxu0 0.0
        %1865 = vmatpush1.msra.mxu0 %v813
        %1866 = vmatprep.subr.mxu0 0.0
        %1867 = vmatpush1.msra.mxu0 0.0
        %1868 = vmatprep.subr.mxu0 0.0
        %1869 = vmatpush1.msra.mxu0 0.0
        %1870 = vmatprep.subr.mxu0 0.0
        %1871 = vmatpush1.msra.mxu0 0.0
        %1872 = vmatprep.subr.mxu0 0.0
        %1873 = vmatpush1.msra.mxu0 0.0
        %1874 = vmatprep.subr.mxu0 0.0
        %1875 = vmatpush1.msra.mxu0 0.0
        %1876 = vmatprep.subr.mxu0 0.0
        %1877 = vmatpush1.msra.mxu0 0.0
        %1878 = vmatprep.subr.mxu0 0.0
        %1879 = vmatpush1.msra.mxu0 0.0
        %1880 = vmatprep.subr.mxu0 0.0
        %1881 = vmatpush1.msra.mxu0 0.0
        %1882 = vmatprep.subr.mxu0 0.0
        %1883 = vmatpush1.msra.mxu0 0.0
        %1884 = vmatprep.subr.mxu0 0.0
        %1885 = vmatpush1.msra.mxu0 0.0
        %1886 = vmatprep.subr.mxu0 0.0
        %1887 = vmatpush1.msra.mxu0 0.0
        %1888 = vmatprep.subr.mxu0 0.0
        %1889 = vmatpush1.msra.mxu0 0.0
        %1890 = vmatprep.subr.mxu0 0.0
        %1891 = vmatpush1.msra.mxu0 0.0
        %1892 = vmatprep.subr.mxu0 0.0
        %1893 = vmatpush1.msra.mxu0 0.0
        %1894 = vmatprep.subr.mxu0 0.0
        %1895 = vmatpush1.msra.mxu0 0.0
        %1896 = vmatprep.subr.mxu0 0.0
        %1897 = vmatpush1.msra.mxu0 0.0
        %1898 = vmatprep.subr.mxu0 0.0
        %1899 = vmatpush1.msra.mxu0 0.0
        %1900 = vmatprep.subr.mxu0 0.0
        %1901 = vmatpush1.msra.mxu0 0.0
        %1902 = vmatprep.subr.mxu0 0.0
        %1903 = vmatpush1.msra.mxu0 0.0
        %1904 = vmatprep.subr.mxu0 0.0
        %1905 = vmatpush1.msra.mxu0 0.0
        %1906 = vmatprep.subr.mxu0 0.0
        %1907 = vmatpush1.msra.mxu0 0.0
        %1908 = vmatprep.mubr.f32.mxu0 0.0
        %1909 = vmatmul.mubr.f32.gmra.mrb[0].mxu0 %v1772
        %v1910 = vpop.f32.mrb[0].mxu0
        %v1911 = vadd.f32 0.0, %v1910
        %v1912 = vpop.f32.mrb[0].mxu0
        %1913 = vdwg.mxu0
        %s1914 = scalar_lea.vmem %s17, 8
        %v1915 = vld [vmem:[%s1914] sm:$0xff]
        %1917 = vset.pattern.permute.xlu0 0
        %1918 = vperm.xlu0 %1917, %v1915
        %v1919 = vpop.permute.xlu0 %1918
        %v1921 = vmul.f32 %v1841, %v1919
        %s1922 = scalar_lea.vmem %s17, 32
        %v1923 = vld [vmem:[%s1922] sm:$0xff]
        %1925 = vset.pattern.permute.xlu0 0
        %1926 = vperm.xlu0 %1925, %v1923
        %v1927 = vpop.permute.xlu0 %1926
        %v1929 = vmul.f32 %v1769, %v1927
        %v1930 = vadd.f32 %v1921, %v1929
        %s1931 = scalar_lea.vmem %s17, 56
        %v1932 = vld [vmem:[%s1931] sm:$0xff]
        %1934 = vset.pattern.permute.xlu0 0
        %1935 = vperm.xlu0 %1934, %v1932
        %v1936 = vpop.permute.xlu0 %1935
        %v1938 = vmul.f32 %v1911, %v1936
        %v1939 = vadd.f32 %v1930, %v1938
        %v1940 = vld [vmem:[%s17] sm:$0xff]
        %1942 = vset.pattern.permute.xlu0 0
        %1943 = vperm.xlu0 %1942, %v1940
        %v1944 = vpop.permute.xlu0 %1943
        %v1946 = vmul.f32 %v1841, %v1944
        %s1947 = scalar_lea.vmem %s17, 24
        %v1948 = vld [vmem:[%s1947] sm:$0xff]
        %1950 = vset.pattern.permute.xlu0 0
        %1951 = vperm.xlu0 %1950, %v1948
        %v1952 = vpop.permute.xlu0 %1951
        %v1954 = vmul.f32 %v1769, %v1952
        %v1955 = vadd.f32 %v1946, %v1954
        %s1956 = scalar_lea.vmem %s17, 48
        %v1957 = vld [vmem:[%s1956] sm:$0xff]
        %1959 = vset.pattern.permute.xlu0 0
        %1960 = vperm.xlu0 %1959, %v1957
        %v1961 = vpop.permute.xlu0 %1960
        %v1963 = vmul.f32 %v1911, %v1961
        %v1964 = vadd.f32 %v1955, %v1963
        %v1966 = vsel %vm714, %v1964, 0
        %1968 = vmatprep.subr.mxu0 0.0
        %1969 = vmatpush1.msra.mxu0 %v987
        %1970 = vmatprep.subr.mxu0 0.0
        %1971 = vmatpush1.msra.mxu0 %v988
        %1972 = vmatprep.subr.mxu0 0.0
        %1973 = vmatpush1.msra.mxu0 %v989
        %1974 = vmatprep.subr.mxu0 0.0
        %1975 = vmatpush1.msra.mxu0 %v990
        %1976 = vmatprep.subr.mxu0 0.0
        %1977 = vmatpush1.msra.mxu0 %v991
        %1978 = vmatprep.subr.mxu0 0.0
        %1979 = vmatpush1.msra.mxu0 %v992
        %1980 = vmatprep.subr.mxu0 0.0
        %1981 = vmatpush1.msra.mxu0 %v993
        %1982 = vmatprep.subr.mxu0 0.0
        %1983 = vmatpush1.msra.mxu0 %v994
        %1984 = vmatprep.subr.mxu0 0.0
        %1985 = vmatpush1.msra.mxu0 %v995
        %1986 = vmatprep.subr.mxu0 0.0
        %1987 = vmatpush1.msra.mxu0 %v996
        %1988 = vmatprep.subr.mxu0 0.0
        %1989 = vmatpush1.msra.mxu0 %v1005
        %1990 = vmatprep.subr.mxu0 0.0
        %1991 = vmatpush1.msra.mxu0 0.0
        %1992 = vmatprep.subr.mxu0 0.0
        %1993 = vmatpush1.msra.mxu0 0.0
        %1994 = vmatprep.subr.mxu0 0.0
        %1995 = vmatpush1.msra.mxu0 0.0
        %1996 = vmatprep.subr.mxu0 0.0
        %1997 = vmatpush1.msra.mxu0 0.0
        %1998 = vmatprep.subr.mxu0 0.0
        %1999 = vmatpush1.msra.mxu0 0.0
        %2000 = vmatprep.subr.mxu0 0.0
        %2001 = vmatpush1.msra.mxu0 0.0
        %2002 = vmatprep.subr.mxu0 0.0
        %2003 = vmatpush1.msra.mxu0 0.0
        %2004 = vmatprep.subr.mxu0 0.0
        %2005 = vmatpush1.msra.mxu0 0.0
        %2006 = vmatprep.subr.mxu0 0.0
        %2007 = vmatpush1.msra.mxu0 0.0
        %2008 = vmatprep.subr.mxu0 0.0
        %2009 = vmatpush1.msra.mxu0 0.0
        %2010 = vmatprep.subr.mxu0 0.0
        %2011 = vmatpush1.msra.mxu0 0.0
        %2012 = vmatprep.subr.mxu0 0.0
        %2013 = vmatpush1.msra.mxu0 0.0
        %2014 = vmatprep.subr.mxu0 0.0
        %2015 = vmatpush1.msra.mxu0 0.0
        %2016 = vmatprep.subr.mxu0 0.0
        %2017 = vmatpush1.msra.mxu0 0.0
        %2018 = vmatprep.subr.mxu0 0.0
        %2019 = vmatpush1.msra.mxu0 0.0
        %2020 = vmatprep.subr.mxu0 0.0
        %2021 = vmatpush1.msra.mxu0 0.0
        %2022 = vmatprep.subr.mxu0 0.0
        %2023 = vmatpush1.msra.mxu0 0.0
        %2024 = vmatprep.subr.mxu0 0.0
        %2025 = vmatpush1.msra.mxu0 0.0
        %2026 = vmatprep.subr.mxu0 0.0
        %2027 = vmatpush1.msra.mxu0 0.0
        %2028 = vmatprep.subr.mxu0 0.0
        %2029 = vmatpush1.msra.mxu0 0.0
        %2030 = vmatprep.subr.mxu0 0.0
        %2031 = vmatpush1.msra.mxu0 0.0
        %2032 = vmatprep.mubr.f32.mxu0 0.0
        %2033 = vmatmul.mubr.f32.gmra.mrb[0].mxu0 %v1966
        %v2034 = vpop.f32.mrb[0].mxu0
        %v2035 = vadd.f32 0.0, %v2034
        %v2036 = vpop.f32.mrb[0].mxu0
        %2037 = vdwg.mxu0
        %v2038 = vadd.f32 %v1939, %v2035
        %s2039 = scalar_lea.vmem %s17, 16
        %v2040 = vld [vmem:[%s2039] sm:$0xff]
        %2042 = vset.pattern.permute.xlu0 0
        %2043 = vperm.xlu0 %2042, %v2040
        %v2044 = vpop.permute.xlu0 %2043
        %v2046 = vmul.f32 %v1841, %v2044
        %s2047 = scalar_lea.vmem %s17, 40
        %v2048 = vld [vmem:[%s2047] sm:$0xff]
        %2050 = vset.pattern.permute.xlu0 0
        %2051 = vperm.xlu0 %2050, %v2048
        %v2052 = vpop.permute.xlu0 %2051
        %v2054 = vmul.f32 %v1769, %v2052
        %v2055 = vadd.f32 %v2046, %v2054
        %s2056 = scalar_lea.vmem %s17, 64
        %v2057 = vld [vmem:[%s2056] sm:$0xff]
        %2059 = vset.pattern.permute.xlu0 0
        %2060 = vperm.xlu0 %2059, %v2057
        %v2061 = vpop.permute.xlu0 %2060
        %v2063 = vmul.f32 %v1911, %v2061
        %v2064 = vadd.f32 %v2055, %v2063
        %v2066 = vsel %vm714, %v2064, 0
        %2068 = vmatprep.subr.mxu0 0.0
        %2069 = vmatpush1.msra.mxu0 %v1134
        %2070 = vmatprep.subr.mxu0 0.0
        %2071 = vmatpush1.msra.mxu0 %v1135
        %2072 = vmatprep.subr.mxu0 0.0
        %2073 = vmatpush1.msra.mxu0 %v1136
        %2074 = vmatprep.subr.mxu0 0.0
        %2075 = vmatpush1.msra.mxu0 %v1137
        %2076 = vmatprep.subr.mxu0 0.0
        %2077 = vmatpush1.msra.mxu0 %v1138
        %2078 = vmatprep.subr.mxu0 0.0
        %2079 = vmatpush1.msra.mxu0 %v1139
        %2080 = vmatprep.subr.mxu0 0.0
        %2081 = vmatpush1.msra.mxu0 %v1140
        %2082 = vmatprep.subr.mxu0 0.0
        %2083 = vmatpush1.msra.mxu0 %v1141
        %2084 = vmatprep.subr.mxu0 0.0
        %2085 = vmatpush1.msra.mxu0 %v1142
        %2086 = vmatprep.subr.mxu0 0.0
        %2087 = vmatpush1.msra.mxu0 %v1143
        %2088 = vmatprep.subr.mxu0 0.0
        %2089 = vmatpush1.msra.mxu0 %v1152
        %2090 = vmatprep.subr.mxu0 0.0
        %2091 = vmatpush1.msra.mxu0 0.0
        %2092 = vmatprep.subr.mxu0 0.0
        %2093 = vmatpush1.msra.mxu0 0.0
        %2094 = vmatprep.subr.mxu0 0.0
        %2095 = vmatpush1.msra.mxu0 0.0
        %2096 = vmatprep.subr.mxu0 0.0
        %2097 = vmatpush1.msra.mxu0 0.0
        %2098 = vmatprep.subr.mxu0 0.0
        %2099 = vmatpush1.msra.mxu0 0.0
        %2100 = vmatprep.subr.mxu0 0.0
        %2101 = vmatpush1.msra.mxu0 0.0
        %2102 = vmatprep.subr.mxu0 0.0
        %2103 = vmatpush1.msra.mxu0 0.0
        %2104 = vmatprep.subr.mxu0 0.0
        %2105 = vmatpush1.msra.mxu0 0.0
        %2106 = vmatprep.subr.mxu0 0.0
        %2107 = vmatpush1.msra.mxu0 0.0
        %2108 = vmatprep.subr.mxu0 0.0
        %2109 = vmatpush1.msra.mxu0 0.0
        %2110 = vmatprep.subr.mxu0 0.0
        %2111 = vmatpush1.msra.mxu0 0.0
        %2112 = vmatprep.subr.mxu0 0.0
        %2113 = vmatpush1.msra.mxu0 0.0
        %2114 = vmatprep.subr.mxu0 0.0
        %2115 = vmatpush1.msra.mxu0 0.0
        %2116 = vmatprep.subr.mxu0 0.0
        %2117 = vmatpush1.msra.mxu0 0.0
        %2118 = vmatprep.subr.mxu0 0.0
        %2119 = vmatpush1.msra.mxu0 0.0
        %2120 = vmatprep.subr.mxu0 0.0
        %2121 = vmatpush1.msra.mxu0 0.0
        %2122 = vmatprep.subr.mxu0 0.0
        %2123 = vmatpush1.msra.mxu0 0.0
        %2124 = vmatprep.subr.mxu0 0.0
        %2125 = vmatpush1.msra.mxu0 0.0
        %2126 = vmatprep.subr.mxu0 0.0
        %2127 = vmatpush1.msra.mxu0 0.0
        %2128 = vmatprep.subr.mxu0 0.0
        %2129 = vmatpush1.msra.mxu0 0.0
        %2130 = vmatprep.subr.mxu0 0.0
        %2131 = vmatpush1.msra.mxu0 0.0
        %2132 = vmatprep.mubr.f32.mxu0 0.0
        %2133 = vmatmul.mubr.f32.gmra.mrb[0].mxu0 %v2066
        %v2134 = vpop.f32.mrb[0].mxu0
        %v2135 = vadd.f32 0.0, %v2134
        %v2136 = vpop.f32.mrb[0].mxu0
        %2137 = vdwg.mxu0
        %v2138 = vadd.f32 %v2038, %v2135
        %2140 = vset.pattern.permute.xlu0 0
        %2141 = vperm.xlu0 %2140, %v1770
        %v2142 = vpop.permute.xlu0 %2141
        %v2144 = vadd.f32 %v2138, %v2142
        %v2145 = vadd.f32 %v1769, %v601
        %2146 = vst.msk [vmem:[%s595] sm:$0xff] %vm714, %v2145
        %v2147 = vadd.f32 %v2144, %v602
        %2148 = vst.msk [vmem:[%s595 + $0x8] sm:$0xff] %vm714, %v2147
        %s2149 = sand.u32 %s445, 1
        %s2150 = scalar_lea.sflag [#allocation3], %s2149
        %s2151 = sand.u32 %s445, 1
        %s2152 = smul.addr %s2151, 16
        %s2153 = scalar_lea.vmem [#allocation2], %s2152
        // Predicated region
        $region97: #{tpu_custom_call.1} parent=95 // pred_check
          %p2154 = pneg %p455
        $region98: #{tpu_custom_call.1} parent=95 // pred_check_branch
          %2156 = sbr.rel (%p2154) target = $region100
        $region99: #{tpu_custom_call.1} parent=95 // pred_region
          %s2158 = ssub.s32 256, 256
          %2159 = vsyncadd %s2150, %s2158
          %s2160 = smul.addr %s33, 2
          %s2161 = smul.addr %s2160, 128
          %s2162 = scalar_lea.hbm %s19, %s2161
          %s2163 = sshll.u32 %s2153, 4
          %s2164 = int_to_ptr.vmem [resolvable:$true] %s2163
          %2169 = dma.vmem_to_hbm [thread:$0]  %s2164, 256, %s2162, %s2150, 128, 128, 8
        $region100: #{tpu_custom_call.1} parent=95 // pred_fallthru
          _
      $region96: #{tpu_custom_call.1} parent=5 // pred_fallthru
        _
      %p2170 = scmp.le.s32.totalorder 2, %s28
      // Predicated region
      $region101: #{tpu_custom_call.1} parent=5 // pred_check
        %p2171 = pneg %p2170
      $region102: #{tpu_custom_call.1} parent=5 // pred_check_branch
        %2173 = sbr.rel (%p2171) target = $region104
      $region103: #{tpu_custom_call.1} parent=5 // pred_region
        %s2174 = ssub.s32 %s28, 2
        // Predicated region
        $region105: #{tpu_custom_call.1} parent=103 // pred_check
          %p2175 = pneg %p461
        $region106: #{tpu_custom_call.1} parent=103 // pred_check_branch
          %2177 = sbr.rel (%p2175) target = $region108
        $region107: #{tpu_custom_call.1} parent=103 // pred_region
          %s2178 = sand.u32 %s446, 1
          %s2179 = scalar_lea.sflag [#allocation3], %s2178
          %s2180 = sand.u32 %s446, 1
          %s2181 = smul.addr %s2180, 16
          %s2182 = scalar_lea.vmem [#allocation2], %s2181
          %2183 = dma.done %s2179, 256
        $region108: #{tpu_custom_call.1} parent=103 // pred_fallthru
          _
      $region104: #{tpu_custom_call.1} parent=5 // pred_fallthru
        _
    $region6: #{tpu_custom_call.1} parent=1 // loop_footer
      %s32 = sadd.s32 1, %s28
    $region7: #{tpu_custom_call.1} parent=1 // loop_footer_branch
      %27 = sbr.rel target = $region3
    $region8: #{tpu_custom_call.1} parent=1 // loop_exit
      _
    %2184 = vsyncpa [#allocation3], 1
    %s2185 = scalar_lea.sflag [#allocation3], 1
    %2186 = vsyncpa %s2185, 1

</llo_original>
